<compile_context>
chip_gen: v6e
topology: v6e:2x2x1
jax: 0.10.0
libtpu: 0.0.40
codegen_flags: <defaults>
</compile_context>

<pallas_src>
import functools

import jax
import jax.numpy as jnp
from jax.experimental import pallas as pl
from jax.experimental.pallas import tpu as pltpu


def _round_up(x, m):
    return ((x + m - 1) // m) * m


# ---------------------------------------------------------------------------
# Shared per-token body: embedding gather + single-step GRU + Bahdanau attention
# ---------------------------------------------------------------------------
def _gru_attention_body(s_len, H,
                        inp_ref, emb_ref, h_ref, enc_ref, encp_ref,
                        wih_ref, whh_ref, bih_ref, bhh_ref,
                        wah_ref, ba_ref, v_ref,
                        x_buf, dma_sems):
    Bp = h_ref.shape[0]
    Sp = enc_ref.shape[1]

    # Embedding gather: one 128-lane (512 B) row DMA per batch element, ids in
    # SMEM.  Issue all starts first so they overlap with the h @ W_hh matmul
    # (which does not depend on x).  Dropout is the identity in eval mode.
    for b in range(Bp):
        pltpu.make_async_copy(emb_ref.at[pl.ds(inp_ref[b], 1), :],
                              x_buf.at[pl.ds(b, 1), :],
                              dma_sems.at[b]).start()

    h = h_ref[...]                                                    # [Bp, H]
    gh = jnp.dot(h, whh_ref[...], preferred_element_type=jnp.float32) + bhh_ref[...]

    for b in range(Bp):
        pltpu.make_async_copy(emb_ref.at[pl.ds(inp_ref[b], 1), :],
                              x_buf.at[pl.ds(b, 1), :],
                              dma_sems.at[b]).wait()
    x = x_buf[...]                                                    # [Bp, Ep]
    gi = jnp.dot(x, wih_ref[...], preferred_element_type=jnp.float32) + bih_ref[...]

    # Single-step GRU cell (PyTorch gate order r|z|n); H is a multiple of 128
    # so the gate slices stay lane-tile aligned.
    r = jax.nn.sigmoid(gi[:, 0 * H:1 * H] + gh[:, 0 * H:1 * H])
    z = jax.nn.sigmoid(gi[:, 1 * H:2 * H] + gh[:, 1 * H:2 * H])
    n = jnp.tanh(gi[:, 2 * H:3 * H] + r * gh[:, 2 * H:3 * H])
    h_new = (1.0 - z) * n + z * h                                     # [Bp, H]

    # Bahdanau attention; the encoder-side projection enc @ W_ae arrives as
    # encp_ref (precomputed once per sequence, possibly bf16).
    e_h = jnp.dot(h_new, wah_ref[...], preferred_element_type=jnp.float32) + ba_ref[...]
    energy = jnp.tanh(e_h[:, None, :] + encp_ref[...].astype(jnp.float32))
    score = jnp.sum(energy * v_ref[...][None, :, :], axis=-1)         # [Bp, Sp]
    if Sp > s_len:                      # mask padded source positions
        col = jax.lax.broadcasted_iota(jnp.int32, (Bp, Sp), 1)
        score = jnp.where(col < s_len, score, -1e30)
    score = score - jnp.max(score, axis=1, keepdims=True)
    p = jnp.exp(score)
    a = p / jnp.sum(p, axis=1, keepdims=True)     # exact normalize (a is returned)
    # attended: VPU multiply + sublane-axis reduce (no M=1 MXU pushes)
    attended = jnp.sum(a[:, :, None] * enc_ref[...].astype(jnp.float32), axis=1)
    return h_new, a, attended                           # [Bp,H], [Bp,Sp], [Bp,E2]


# ---------------------------------------------------------------------------
# Split path (v7x): kernel A = prologue, kernel B = vocab-parallel fc_out
# ---------------------------------------------------------------------------
def _attn_gru_kernel(s_len, H,
                     inp_ref, emb_ref, h_ref, enc_ref, encp_ref,
                     wih_ref, whh_ref, bih_ref, bhh_ref,
                     wah_ref, ba_ref, v_ref,
                     hnew_ref, a_ref, act_ref,
                     x_buf, dma_sems):
    h_new, a, attended = _gru_attention_body(
        s_len, H, inp_ref, emb_ref, h_ref, enc_ref, encp_ref,
        wih_ref, whh_ref, bih_ref, bhh_ref, wah_ref, ba_ref, v_ref,
        x_buf, dma_sems)
    hnew_ref[...] = h_new
    a_ref[...] = a
    act_ref[:, :H] = h_new                 # [h_new | attended] for fc_out
    act_ref[:, H:] = attended


def _fc_out_kernel(act_ref, w_ref, b_ref, out_ref):
    out_ref[...] = (jnp.dot(act_ref[...].astype(jnp.bfloat16), w_ref[...],
                            preferred_element_type=jnp.float32) + b_ref[...])


# ---------------------------------------------------------------------------
# Fused path (v5e/v6e): prologue under pl.when(j == 0) inside the fc_out grid
# ---------------------------------------------------------------------------
def _fused_decoder_kernel(s_len, H,
                          inp_ref, emb_ref, h_ref, enc_ref, encp_ref,
                          wih_ref, whh_ref, bih_ref, bhh_ref,
                          wah_ref, ba_ref, v_ref,
                          wcat_ref, bfc_ref,
                          hnew_ref, a_ref, out_ref,
                          act_scr, x_buf, dma_sems):
    @pl.when(pl.program_id(0) == 0)
    def _():
        h_new, a, attended = _gru_attention_body(
            s_len, H, inp_ref, emb_ref, h_ref, enc_ref, encp_ref,
            wih_ref, whh_ref, bih_ref, bhh_ref, wah_ref, ba_ref, v_ref,
            x_buf, dma_sems)
        hnew_ref[...] = h_new
        a_ref[...] = a
        act_scr[:, :H] = h_new             # persists in VMEM across vocab tiles
        act_scr[:, H:] = attended

    out_ref[...] = (jnp.dot(act_scr[...].astype(jnp.bfloat16), wcat_ref[...],
                            preferred_element_type=jnp.float32) + bfc_ref[...])


# ---------------------------------------------------------------------------
# Parameter / context preparation
# ---------------------------------------------------------------------------
def _pick_tile_n(o, k_dim, *, max_tile_n=1024, vmem_budget=8 * 1024 * 1024):
    """Vocab tile width: biggest 128-multiple whose double-buffered working set
    (bf16 weight cols + f32 bias + f32 output cols) fits the budget, capped at
    max_tile_n (kept conservative for v7x's 64 MiB VMEM)."""
    per_col = 2 * (k_dim * 2 + 4 + 8 * 4)
    tn = max(128, min(max_tile_n, (vmem_budget // per_col) // 128 * 128))
    return min(tn, _round_up(o, 128))


def prepare_params(params, *, max_tile_n=1024):
    """One-time weight prep:
      * embedding columns / matching W_ih rows padded to a 128-lane multiple,
      * fc_out weights concatenated into one [(H+2Eh), Op] bf16 matrix whose
        padded vocab width Op is a multiple of the vocab tile (tile never has
        to shrink to divide an awkward vocab size)."""
    H = params['w_hh_t'].shape[0]
    V, E = params['embedding'].shape
    E2 = params['fc_w_a'].shape[0]
    O = params['fc_w_h'].shape[1]
    Ep = _round_up(E, 128)
    K = H + E2

    tn = _pick_tile_n(O, K, max_tile_n=max_tile_n)
    Op = _round_up(O, tn)

    prep = dict(params)
    prep['embedding_p'] = jnp.zeros((V, Ep), jnp.float32).at[:, :E].set(
        params['embedding'])
    prep['w_ih_p'] = jnp.zeros((Ep, 3 * H), jnp.float32).at[:E, :].set(
        params['w_ih_t'])
    w_cat = jnp.zeros((K, Op), jnp.bfloat16)
    w_cat = w_cat.at[:H, :O].set(params['fc_w_h'].astype(jnp.bfloat16))
    w_cat = w_cat.at[H:, :O].set(params['fc_w_a'].astype(jnp.bfloat16))
    prep['fc_w_cat'] = w_cat
    prep['fc_b_p'] = jnp.zeros((1, Op), jnp.float32).at[:, :O].set(params['fc_b'])
    prep['output_dim'] = O
    prep['tile_n'] = tn
    return prep


def precompute_encoder_context(prep, encoder_outputs, *, enc_dtype=jnp.float32):
    """Runs ONCE per source sequence: seq-first -> batch-first permute and the
    encoder-side attention projection (independent of the decoder state)."""
    S, B, E2 = encoder_outputs.shape
    H = prep['w_attn_h_t'].shape[0]
    Bp, Sp = _round_up(B, 8), _round_up(S, 8)
    enc = jnp.transpose(encoder_outputs, (1, 0, 2))                    # [B,S,2Eh]
    enc_proj = jnp.einsum('bse,eh->bsh', enc, prep['w_attn_e_t'])      # [B,S,H]
    enc_p = jnp.zeros((Bp, Sp, E2), enc_dtype).at[:B, :S].set(enc.astype(enc_dtype))
    encp_p = jnp.zeros((Bp, Sp, H), enc_dtype).at[:B, :S].set(
        enc_proj.astype(enc_dtype))
    return enc_p, encp_p


# ---------------------------------------------------------------------------
# Per-token decode step on padded buffers
# ---------------------------------------------------------------------------
def decoder_step_padded(prep, inp_p, hid_p, enc_p, encp_p, *, s_len, fuse):
    """One decode step on padded buffers (Bp multiple of 8).  Suitable for a
    lax.scan decode loop: no per-token padding or slicing happens here.
    Returns (pred_p [Bp,Op], h_new [Bp,H], a [Bp,Sp])."""
    Bp, H = hid_p.shape
    _, Sp, E2 = enc_p.shape
    Ep = prep['embedding_p'].shape[1]
    K, Op = prep['fc_w_cat'].shape
    tn = prep['tile_n']
    n_tiles = Op // tn

    smem = pl.BlockSpec(memory_space=pltpu.MemorySpace.SMEM)
    hbm = pl.BlockSpec(memory_space=pl.ANY)
    vmem = pl.BlockSpec(memory_space=pltpu.MemorySpace.VMEM)

    gru_attn_args = (inp_p, prep['embedding_p'], hid_p, enc_p, encp_p,
                     prep['w_ih_p'], prep['w_hh_t'], prep['b_ih'], prep['b_hh'],
                     prep['w_attn_h_t'], prep['b_attn'], prep['v'])

    gru_flops = 2 * Bp * (Ep + 2 * H) * 3 * H + 2 * Bp * H * H + 2 * Bp * Sp * (E2 + H)
    gru_trans = Bp * 3 * H + Bp * Sp * (H + 1)
    gru_bytes = 4 * (Bp * (Ep + 2 * H + Sp + E2) + (Ep + 2 * H) * 3 * H + H * H) \
        + Bp * Sp * (E2 + H) * enc_p.dtype.itemsize
    fc_flops = 2 * Bp * K * Op
    fc_bytes = K * Op * 2 + Op * 4 + Bp * (K * 4 + Op * 4)

    if fuse:
        # One launch per token: GRU/attention prologue at j == 0, then the
        # vocab-tiled fc_out matmul (sequential grid; best on 1-TC v5e/v6e).
        def const_spec(shape):
            zeros = (0,) * len(shape)
            return pl.BlockSpec(shape, lambda j: zeros)

        in_specs = [smem, hbm,
                    const_spec((Bp, H)), const_spec((Bp, Sp, E2)),
                    const_spec((Bp, Sp, H)),
                    const_spec((Ep, 3 * H)), const_spec((H, 3 * H)),
                    const_spec((1, 3 * H)), const_spec((1, 3 * H)),
                    const_spec((H, H)), const_spec((1, H)), const_spec((1, H)),
                    pl.BlockSpec((K, tn), lambda j: (0, j)),
                    pl.BlockSpec((1, tn), lambda j: (0, j))]
        out_specs = (pl.BlockSpec((Bp, H), lambda j: (0, 0)),
                     pl.BlockSpec((Bp, Sp), lambda j: (0, 0)),
                     pl.BlockSpec((Bp, tn), lambda j: (0, j)))
        h_new, a_p, pred_p = pl.pallas_call(
            functools.partial(_fused_decoder_kernel, s_len, H),
            grid=(n_tiles,),
            out_shape=(jax.ShapeDtypeStruct((Bp, H), jnp.float32),
                       jax.ShapeDtypeStruct((Bp, Sp), jnp.float32),
                       jax.ShapeDtypeStruct((Bp, Op), jnp.float32)),
            in_specs=in_specs,
            out_specs=out_specs,
            scratch_shapes=[pltpu.VMEM((Bp, K), jnp.float32),   # [h|attended]
                            pltpu.VMEM((Bp, Ep), jnp.float32),  # gathered x
                            pltpu.SemaphoreType.DMA((Bp,))],
            compiler_params=pltpu.CompilerParams(
                dimension_semantics=("arbitrary",),
                vmem_limit_bytes=32 * 1024 * 1024),
            cost_estimate=pl.CostEstimate(flops=gru_flops + fc_flops,
                                          transcendentals=gru_trans,
                                          bytes_accessed=gru_bytes + fc_bytes),
        )(*gru_attn_args, prep['fc_w_cat'], prep['fc_b_p'])
        return pred_p, h_new, a_p

    # Split path (v7x): prologue kernel + vocab-parallel fc_out kernel.
    h_new, a_p, act = pl.pallas_call(
        functools.partial(_attn_gru_kernel, s_len, H),
        out_shape=(jax.ShapeDtypeStruct((Bp, H), jnp.float32),
                   jax.ShapeDtypeStruct((Bp, Sp), jnp.float32),
                   jax.ShapeDtypeStruct((Bp, K), jnp.float32)),
        in_specs=[smem, hbm] + [vmem] * 10,
        out_specs=(vmem, vmem, vmem),
        scratch_shapes=[pltpu.VMEM((Bp, Ep), jnp.float32),
                        pltpu.SemaphoreType.DMA((Bp,))],
        input_output_aliases={2: 0},            # hidden buffer reused for h_new
        compiler_params=pltpu.CompilerParams(vmem_limit_bytes=32 * 1024 * 1024),
        cost_estimate=pl.CostEstimate(flops=gru_flops, transcendentals=gru_trans,
                                      bytes_accessed=gru_bytes),
    )(*gru_attn_args)

    pred_p = pl.pallas_call(
        _fc_out_kernel,
        grid=(n_tiles,),
        out_shape=jax.ShapeDtypeStruct((Bp, Op), jnp.float32),
        in_specs=[pl.BlockSpec((Bp, K), lambda j: (0, 0)),
                  pl.BlockSpec((K, tn), lambda j: (0, j)),
                  pl.BlockSpec((1, tn), lambda j: (0, j))],
        out_specs=pl.BlockSpec((Bp, tn), lambda j: (0, j)),
        compiler_params=pltpu.CompilerParams(
            dimension_semantics=("parallel",),     # 2-TC vocab sharding on v7x
            vmem_limit_bytes=32 * 1024 * 1024),
        cost_estimate=pl.CostEstimate(flops=fc_flops, transcendentals=0,
                                      bytes_accessed=fc_bytes),
    )(act, prep['fc_w_cat'], prep['fc_b_p'])
    return pred_p, h_new, a_p


# ---------------------------------------------------------------------------
# Top-level wrapper matching the PyTorch forward contract
# ---------------------------------------------------------------------------
def default_config():
    """Fused single-kernel path on 1-TC chips (v5e/v6e); split 2-kernel path
    with a parallel vocab grid on v7x; bf16 encoder context only where the
    VPU/EUP handle bf16 natively (v6e/v7x)."""
    try:
        kind = jax.devices()[0].device_kind.lower()
    except Exception:
        kind = ""
    multi_tc = "v7" in kind
    bf16_ok = ("v6" in kind) or ("v7" in kind)
    return dict(fuse=not multi_tc,
                enc_dtype=jnp.bfloat16 if bf16_ok else jnp.float32)


def decoder_forward(prep, inp, hidden, encoder_outputs, *, fuse=None, enc_dtype=None):
    """Same contract as Decoder.forward: inp [B] int token ids, hidden [B,H],
    encoder_outputs [S,B,2*Eh] (seq-first).  Returns (prediction [1,B,O],
    hidden [B,H], attention weights [B,S])."""
    cfg = default_config()
    fuse = cfg['fuse'] if fuse is None else fuse
    enc_dtype = cfg['enc_dtype'] if enc_dtype is None else enc_dtype

    B, H = hidden.shape
    S = encoder_outputs.shape[0]
    O = prep['output_dim']
    Bp = _round_up(B, 8)

    enc_p, encp_p = precompute_encoder_context(prep, encoder_outputs,
                                               enc_dtype=enc_dtype)
    # Pad once.  In a multi-token decode loop this padding and the final slicing
    # would be hoisted outside lax.scan so the per-token step stays on padded
    # buffers (no per-step re-pad / re-slice).
    inp_p = jnp.zeros((Bp,), jnp.int32).at[:B].set(inp.astype(jnp.int32))
    hid_p = jnp.zeros((Bp, H), jnp.float32).at[:B].set(hidden)

    pred_p, h_new_p, a_p = decoder_step_padded(prep, inp_p, hid_p, enc_p, encp_p,
                                               s_len=S, fuse=fuse)
    return pred_p[None, :B, :O], h_new_p[:B], a_p[:B, :S]


# ---------------------------------------------------------------------------
# Pure-JAX fp32 reference (spec) and parameter init
# ---------------------------------------------------------------------------
def decoder_ref(params, inp, hidden, encoder_outputs):
    x = jnp.take(params['embedding'], inp, axis=0)
    h = hidden
    H = h.shape[1]
    gi = x @ params['w_ih_t'] + params['b_ih']
    gh = h @ params['w_hh_t'] + params['b_hh']
    r = jax.nn.sigmoid(gi[:, :H] + gh[:, :H])
    z = jax.nn.sigmoid(gi[:, H:2 * H] + gh[:, H:2 * H])
    n = jnp.tanh(gi[:, 2 * H:] + r * gh[:, 2 * H:])
    h_new = (1.0 - z) * n + z * h
    enc = jnp.transpose(encoder_outputs, (1, 0, 2))
    e_h = h_new @ params['w_attn_h_t'] + params['b_attn']
    e_e = jnp.einsum('bse,eh->bsh', enc, params['w_attn_e_t'])
    energy = jnp.tanh(e_h[:, None, :] + e_e)
    score = jnp.sum(energy * params['v'][None], axis=-1)
    a = jax.nn.softmax(score, axis=1)
    attended = jnp.einsum('bs,bse->be', a, enc)
    pred = h_new @ params['fc_w_h'] + attended @ params['fc_w_a'] + params['fc_b']
    return pred[None], h_new, a


def init_params(key, output_dim, emb_dim, enc_hid_dim, dec_hid_dim):
    ks = jax.random.split(key, 12)
    H = dec_hid_dim

    def rnd(k, shape, scale=0.1):
        return jax.random.normal(k, shape, jnp.float32) * scale

    return dict(
        embedding=rnd(ks[0], (output_dim, emb_dim)),
        # GRU (weights transposed to (in, 3H); gate order r|z|n as in PyTorch).
        w_ih_t=rnd(ks[1], (emb_dim, 3 * H)),
        w_hh_t=rnd(ks[2], (H, 3 * H)),
        b_ih=rnd(ks[3], (1, 3 * H)),
        b_hh=rnd(ks[4], (1, 3 * H)),
        # Attention: Linear((2*enc_hid + dec_hid) -> dec_hid) split into the
        # hidden and encoder-output column blocks of the cat; v: (dec_hid -> 1).
        w_attn_h_t=rnd(ks[5], (H, H)),
        w_attn_e_t=rnd(ks[6], (2 * enc_hid_dim, H)),
        b_attn=rnd(ks[7], (1, H)),
        v=rnd(ks[8], (1, H)),
        # fc_out: Linear((2*enc_hid + dec_hid) -> output_dim), split likewise.
        fc_w_h=rnd(ks[9], (H, output_dim)),
        fc_w_a=rnd(ks[10], (2 * enc_hid_dim, output_dim)),
        fc_b=rnd(ks[11], (1, output_dim)),
    )


if __name__ == "__main__":
    key = jax.random.PRNGKey(0)
    k_p, k_in, k_h, k_enc = jax.random.split(key, 4)

    # TPU-friendly small shapes: H and 2*enc_hid are multiples of 128, vocab is
    # a multiple of 128; B=2, S=10 exercise batch / source-length padding.
    output_dim, emb_dim, enc_hid_dim, dec_hid_dim = 512, 32, 64, 128
    B, S = 2, 10

    params = init_params(k_p, output_dim, emb_dim, enc_hid_dim, dec_hid_dim)
    # max_tile_n=256 -> padded vocab 512 covered by 2 tiles (exercises the grid).
    prep = prepare_params(params, max_tile_n=256)

    inp = jax.random.randint(k_in, (B,), 0, output_dim, dtype=jnp.int32)
    hidden = jax.random.normal(k_h, (B, dec_hid_dim), jnp.float32)
    encoder_outputs = jax.random.normal(k_enc, (S, B, 2 * enc_hid_dim), jnp.float32)

    pred_r, h_r, a_r = decoder_ref(params, inp, hidden, encoder_outputs)

    # Exercise BOTH code paths (fused single-kernel for 1-TC chips, split
    # 2-kernel with the parallel vocab grid for v7x); both must match the
    # pure-JAX f32 reference (fc_out runs with bf16 weights, hence the looser
    # logit tolerance; the attention softmax itself is exact).
    for fuse in (True, False):
        pred, h_new, a = decoder_forward(prep, inp, hidden, encoder_outputs,
                                         fuse=fuse)
        jax.block_until_ready((pred, h_new, a))

        assert pred.shape == (1, B, output_dim)
        assert h_new.shape == (B, dec_hid_dim)
        assert a.shape == (B, S)

        assert jnp.allclose(h_new, h_r, rtol=1e-4, atol=1e-4), \
            (fuse, float(jnp.max(jnp.abs(h_new - h_r))))
        assert jnp.allclose(a, a_r, rtol=5e-3, atol=5e-3), \
            (fuse, float(jnp.max(jnp.abs(a - a_r))))
        assert jnp.allclose(pred, pred_r, rtol=5e-2, atol=5e-2), \
            (fuse, float(jnp.max(jnp.abs(pred - pred_r))))

    print("KERNEL_OK")
</pallas_src>

<mosaic_0001>
module attributes {stable_mosaic.version = 11 : i64} {
  func.func @_fused_decoder_kernel(%arg0: i32, %arg1: memref<8xi32, #tpu.memory_space<smem>>, %arg2: memref<512x128xf32, #tpu.memory_space<any>>, %arg3: memref<8x128xf32, #tpu.memory_space<vmem>>, %arg4: memref<8x16x128xf32, #tpu.memory_space<vmem>>, %arg5: memref<8x16x128xf32, #tpu.memory_space<vmem>>, %arg6: memref<128x384xf32, #tpu.memory_space<vmem>>, %arg7: memref<128x384xf32, #tpu.memory_space<vmem>>, %arg8: memref<1x384xf32, #tpu.memory_space<vmem>>, %arg9: memref<1x384xf32, #tpu.memory_space<vmem>>, %arg10: memref<128x128xf32, #tpu.memory_space<vmem>>, %arg11: memref<1x128xf32, #tpu.memory_space<vmem>>, %arg12: memref<1x128xf32, #tpu.memory_space<vmem>>, %arg13: memref<256x256xbf16, #tpu.memory_space<vmem>>, %arg14: memref<1x256xf32, #tpu.memory_space<vmem>>, %arg15: memref<8x128xf32, #tpu.memory_space<vmem>>, %arg16: memref<8x16xf32, #tpu.memory_space<vmem>>, %arg17: memref<8x256xf32, #tpu.memory_space<vmem>>, %arg18: memref<8x256xf32, #tpu.memory_space<vmem>>, %arg19: memref<8x128xf32, #tpu.memory_space<vmem>>, %arg20: memref<8x!tpu.dma_semaphore, #tpu.memory_space<semaphore_mem>>) attributes {dimension_semantics = [#tpu.dimension_semantics<arbitrary>], iteration_bounds = array<i64: 2>, scalar_prefetch = 0 : i64, scratch_operands = 3 : i64, tpu.core_type = #tpu.core_type<tc>, window_params = [{transform_indices = @transform_0, window_bounds = array<i64: 8>}, {}, {pipeline_mode = #tpu.pipeline_mode<synchronous>, transform_indices = @transform_2, window_bounds = array<i64: 8, 128>}, {pipeline_mode = #tpu.pipeline_mode<synchronous>, transform_indices = @transform_3, window_bounds = array<i64: 8, 16, 128>}, {pipeline_mode = #tpu.pipeline_mode<synchronous>, transform_indices = @transform_4, window_bounds = array<i64: 8, 16, 128>}, {pipeline_mode = #tpu.pipeline_mode<synchronous>, transform_indices = @transform_5, window_bounds = array<i64: 128, 384>}, {pipeline_mode = #tpu.pipeline_mode<synchronous>, transform_indices = @transform_6, window_bounds = array<i64: 128, 384>}, {pipeline_mode = #tpu.pipeline_mode<synchronous>, transform_indices = @transform_7, window_bounds = array<i64: 1, 384>}, {pipeline_mode = #tpu.pipeline_mode<synchronous>, transform_indices = @transform_8, window_bounds = array<i64: 1, 384>}, {pipeline_mode = #tpu.pipeline_mode<synchronous>, transform_indices = @transform_9, window_bounds = array<i64: 128, 128>}, {pipeline_mode = #tpu.pipeline_mode<synchronous>, transform_indices = @transform_10, window_bounds = array<i64: 1, 128>}, {pipeline_mode = #tpu.pipeline_mode<synchronous>, transform_indices = @transform_11, window_bounds = array<i64: 1, 128>}, {transform_indices = @transform_12, window_bounds = array<i64: 256, 256>}, {transform_indices = @transform_13, window_bounds = array<i64: 1, 256>}, {pipeline_mode = #tpu.pipeline_mode<synchronous>, transform_indices = @transform_14, window_bounds = array<i64: 8, 128>}, {pipeline_mode = #tpu.pipeline_mode<synchronous>, transform_indices = @transform_15, window_bounds = array<i64: 8, 16>}, {transform_indices = @transform_16, window_bounds = array<i64: 8, 256>}]} {
    %c0_i32 = arith.constant 0 : i32
    %0 = arith.cmpi eq, %arg0, %c0_i32 : i32
    %1 = arith.extui %0 : i1 to i32
    %c0_i32_0 = arith.constant 0 : i32
    %2 = arith.cmpi ne, %1, %c0_i32_0 : i32
    scf.if %2 {
      %c0_8 = arith.constant 0 : index
      %11 = memref.load %arg1[%c0_8] : memref<8xi32, #tpu.memory_space<smem>>
      %c0_i32_9 = arith.constant 0 : i32
      %c0_i32_10 = arith.constant 0 : i32
      %12 = tpu.memref_slice %arg2[%11, %c0_i32_10] : memref<512x128xf32, #tpu.memory_space<any>> -> memref<1x128xf32, #tpu.memory_space<any>>
      %c0_i32_11 = arith.constant 0 : i32
      %c0_i32_12 = arith.constant 0 : i32
      %13 = tpu.memref_slice %arg19[%c0_i32_11, %c0_i32_12] : memref<8x128xf32, #tpu.memory_space<vmem>> -> memref<1x128xf32, #tpu.memory_space<vmem>>
      %14 = tpu.memref_slice %arg20[%c0_i32_9] : memref<8x!tpu.dma_semaphore, #tpu.memory_space<semaphore_mem>> -> memref<1x!tpu.dma_semaphore, #tpu.memory_space<semaphore_mem>>
      %15 = tpu.memref_squeeze %14 : memref<1x!tpu.dma_semaphore, #tpu.memory_space<semaphore_mem>> -> memref<!tpu.dma_semaphore, #tpu.memory_space<semaphore_mem>>
      tpu.enqueue_dma source(%12 : memref<1x128xf32, #tpu.memory_space<any>>) target(%13 : memref<1x128xf32, #tpu.memory_space<vmem>>) target_semaphore(%15 : memref<!tpu.dma_semaphore, #tpu.memory_space<semaphore_mem>>)
      %c1 = arith.constant 1 : index
      %16 = memref.load %arg1[%c1] : memref<8xi32, #tpu.memory_space<smem>>
      %c1_i32 = arith.constant 1 : i32
      %c0_i32_13 = arith.constant 0 : i32
      %17 = tpu.memref_slice %arg2[%16, %c0_i32_13] : memref<512x128xf32, #tpu.memory_space<any>> -> memref<1x128xf32, #tpu.memory_space<any>>
      %c1_i32_14 = arith.constant 1 : i32
      %c0_i32_15 = arith.constant 0 : i32
      %18 = tpu.memref_slice %arg19[%c1_i32_14, %c0_i32_15] : memref<8x128xf32, #tpu.memory_space<vmem>> -> memref<1x128xf32, #tpu.memory_space<vmem>>
      %19 = tpu.memref_slice %arg20[%c1_i32] : memref<8x!tpu.dma_semaphore, #tpu.memory_space<semaphore_mem>> -> memref<1x!tpu.dma_semaphore, #tpu.memory_space<semaphore_mem>>
      %20 = tpu.memref_squeeze %19 : memref<1x!tpu.dma_semaphore, #tpu.memory_space<semaphore_mem>> -> memref<!tpu.dma_semaphore, #tpu.memory_space<semaphore_mem>>
      tpu.enqueue_dma source(%17 : memref<1x128xf32, #tpu.memory_space<any>>) target(%18 : memref<1x128xf32, #tpu.memory_space<vmem>>) target_semaphore(%20 : memref<!tpu.dma_semaphore, #tpu.memory_space<semaphore_mem>>)
      %c2 = arith.constant 2 : index
      %21 = memref.load %arg1[%c2] : memref<8xi32, #tpu.memory_space<smem>>
      %c2_i32 = arith.constant 2 : i32
      %c0_i32_16 = arith.constant 0 : i32
      %22 = tpu.memref_slice %arg2[%21, %c0_i32_16] : memref<512x128xf32, #tpu.memory_space<any>> -> memref<1x128xf32, #tpu.memory_space<any>>
      %c2_i32_17 = arith.constant 2 : i32
      %c0_i32_18 = arith.constant 0 : i32
      %23 = tpu.memref_slice %arg19[%c2_i32_17, %c0_i32_18] : memref<8x128xf32, #tpu.memory_space<vmem>> -> memref<1x128xf32, #tpu.memory_space<vmem>>
      %24 = tpu.memref_slice %arg20[%c2_i32] : memref<8x!tpu.dma_semaphore, #tpu.memory_space<semaphore_mem>> -> memref<1x!tpu.dma_semaphore, #tpu.memory_space<semaphore_mem>>
      %25 = tpu.memref_squeeze %24 : memref<1x!tpu.dma_semaphore, #tpu.memory_space<semaphore_mem>> -> memref<!tpu.dma_semaphore, #tpu.memory_space<semaphore_mem>>
      tpu.enqueue_dma source(%22 : memref<1x128xf32, #tpu.memory_space<any>>) target(%23 : memref<1x128xf32, #tpu.memory_space<vmem>>) target_semaphore(%25 : memref<!tpu.dma_semaphore, #tpu.memory_space<semaphore_mem>>)
      %c3 = arith.constant 3 : index
      %26 = memref.load %arg1[%c3] : memref<8xi32, #tpu.memory_space<smem>>
      %c3_i32 = arith.constant 3 : i32
      %c0_i32_19 = arith.constant 0 : i32
      %27 = tpu.memref_slice %arg2[%26, %c0_i32_19] : memref<512x128xf32, #tpu.memory_space<any>> -> memref<1x128xf32, #tpu.memory_space<any>>
      %c3_i32_20 = arith.constant 3 : i32
      %c0_i32_21 = arith.constant 0 : i32
      %28 = tpu.memref_slice %arg19[%c3_i32_20, %c0_i32_21] : memref<8x128xf32, #tpu.memory_space<vmem>> -> memref<1x128xf32, #tpu.memory_space<vmem>>
      %29 = tpu.memref_slice %arg20[%c3_i32] : memref<8x!tpu.dma_semaphore, #tpu.memory_space<semaphore_mem>> -> memref<1x!tpu.dma_semaphore, #tpu.memory_space<semaphore_mem>>
      %30 = tpu.memref_squeeze %29 : memref<1x!tpu.dma_semaphore, #tpu.memory_space<semaphore_mem>> -> memref<!tpu.dma_semaphore, #tpu.memory_space<semaphore_mem>>
      tpu.enqueue_dma source(%27 : memref<1x128xf32, #tpu.memory_space<any>>) target(%28 : memref<1x128xf32, #tpu.memory_space<vmem>>) target_semaphore(%30 : memref<!tpu.dma_semaphore, #tpu.memory_space<semaphore_mem>>)
      %c4 = arith.constant 4 : index
      %31 = memref.load %arg1[%c4] : memref<8xi32, #tpu.memory_space<smem>>
      %c4_i32 = arith.constant 4 : i32
      %c0_i32_22 = arith.constant 0 : i32
      %32 = tpu.memref_slice %arg2[%31, %c0_i32_22] : memref<512x128xf32, #tpu.memory_space<any>> -> memref<1x128xf32, #tpu.memory_space<any>>
      %c4_i32_23 = arith.constant 4 : i32
      %c0_i32_24 = arith.constant 0 : i32
      %33 = tpu.memref_slice %arg19[%c4_i32_23, %c0_i32_24] : memref<8x128xf32, #tpu.memory_space<vmem>> -> memref<1x128xf32, #tpu.memory_space<vmem>>
      %34 = tpu.memref_slice %arg20[%c4_i32] : memref<8x!tpu.dma_semaphore, #tpu.memory_space<semaphore_mem>> -> memref<1x!tpu.dma_semaphore, #tpu.memory_space<semaphore_mem>>
      %35 = tpu.memref_squeeze %34 : memref<1x!tpu.dma_semaphore, #tpu.memory_space<semaphore_mem>> -> memref<!tpu.dma_semaphore, #tpu.memory_space<semaphore_mem>>
      tpu.enqueue_dma source(%32 : memref<1x128xf32, #tpu.memory_space<any>>) target(%33 : memref<1x128xf32, #tpu.memory_space<vmem>>) target_semaphore(%35 : memref<!tpu.dma_semaphore, #tpu.memory_space<semaphore_mem>>)
      %c5 = arith.constant 5 : index
      %36 = memref.load %arg1[%c5] : memref<8xi32, #tpu.memory_space<smem>>
      %c5_i32 = arith.constant 5 : i32
      %c0_i32_25 = arith.constant 0 : i32
      %37 = tpu.memref_slice %arg2[%36, %c0_i32_25] : memref<512x128xf32, #tpu.memory_space<any>> -> memref<1x128xf32, #tpu.memory_space<any>>
      %c5_i32_26 = arith.constant 5 : i32
      %c0_i32_27 = arith.constant 0 : i32
      %38 = tpu.memref_slice %arg19[%c5_i32_26, %c0_i32_27] : memref<8x128xf32, #tpu.memory_space<vmem>> -> memref<1x128xf32, #tpu.memory_space<vmem>>
      %39 = tpu.memref_slice %arg20[%c5_i32] : memref<8x!tpu.dma_semaphore, #tpu.memory_space<semaphore_mem>> -> memref<1x!tpu.dma_semaphore, #tpu.memory_space<semaphore_mem>>
      %40 = tpu.memref_squeeze %39 : memref<1x!tpu.dma_semaphore, #tpu.memory_space<semaphore_mem>> -> memref<!tpu.dma_semaphore, #tpu.memory_space<semaphore_mem>>
      tpu.enqueue_dma source(%37 : memref<1x128xf32, #tpu.memory_space<any>>) target(%38 : memref<1x128xf32, #tpu.memory_space<vmem>>) target_semaphore(%40 : memref<!tpu.dma_semaphore, #tpu.memory_space<semaphore_mem>>)
      %c6 = arith.constant 6 : index
      %41 = memref.load %arg1[%c6] : memref<8xi32, #tpu.memory_space<smem>>
      %c6_i32 = arith.constant 6 : i32
      %c0_i32_28 = arith.constant 0 : i32
      %42 = tpu.memref_slice %arg2[%41, %c0_i32_28] : memref<512x128xf32, #tpu.memory_space<any>> -> memref<1x128xf32, #tpu.memory_space<any>>
      %c6_i32_29 = arith.constant 6 : i32
      %c0_i32_30 = arith.constant 0 : i32
      %43 = tpu.memref_slice %arg19[%c6_i32_29, %c0_i32_30] : memref<8x128xf32, #tpu.memory_space<vmem>> -> memref<1x128xf32, #tpu.memory_space<vmem>>
      %44 = tpu.memref_slice %arg20[%c6_i32] : memref<8x!tpu.dma_semaphore, #tpu.memory_space<semaphore_mem>> -> memref<1x!tpu.dma_semaphore, #tpu.memory_space<semaphore_mem>>
      %45 = tpu.memref_squeeze %44 : memref<1x!tpu.dma_semaphore, #tpu.memory_space<semaphore_mem>> -> memref<!tpu.dma_semaphore, #tpu.memory_space<semaphore_mem>>
      tpu.enqueue_dma source(%42 : memref<1x128xf32, #tpu.memory_space<any>>) target(%43 : memref<1x128xf32, #tpu.memory_space<vmem>>) target_semaphore(%45 : memref<!tpu.dma_semaphore, #tpu.memory_space<semaphore_mem>>)
      %c7 = arith.constant 7 : index
      %46 = memref.load %arg1[%c7] : memref<8xi32, #tpu.memory_space<smem>>
      %c7_i32 = arith.constant 7 : i32
      %c0_i32_31 = arith.constant 0 : i32
      %47 = tpu.memref_slice %arg2[%46, %c0_i32_31] : memref<512x128xf32, #tpu.memory_space<any>> -> memref<1x128xf32, #tpu.memory_space<any>>
      %c7_i32_32 = arith.constant 7 : i32
      %c0_i32_33 = arith.constant 0 : i32
      %48 = tpu.memref_slice %arg19[%c7_i32_32, %c0_i32_33] : memref<8x128xf32, #tpu.memory_space<vmem>> -> memref<1x128xf32, #tpu.memory_space<vmem>>
      %49 = tpu.memref_slice %arg20[%c7_i32] : memref<8x!tpu.dma_semaphore, #tpu.memory_space<semaphore_mem>> -> memref<1x!tpu.dma_semaphore, #tpu.memory_space<semaphore_mem>>
      %50 = tpu.memref_squeeze %49 : memref<1x!tpu.dma_semaphore, #tpu.memory_space<semaphore_mem>> -> memref<!tpu.dma_semaphore, #tpu.memory_space<semaphore_mem>>
      tpu.enqueue_dma source(%47 : memref<1x128xf32, #tpu.memory_space<any>>) target(%48 : memref<1x128xf32, #tpu.memory_space<vmem>>) target_semaphore(%50 : memref<!tpu.dma_semaphore, #tpu.memory_space<semaphore_mem>>)
      %c0_34 = arith.constant 0 : index
      %c0_35 = arith.constant 0 : index
      %51 = vector.load %arg3[%c0_34, %c0_35] : memref<8x128xf32, #tpu.memory_space<vmem>>, vector<8x128xf32>
      %c0_36 = arith.constant 0 : index
      %c0_37 = arith.constant 0 : index
      %52 = vector.load %arg7[%c0_36, %c0_37] : memref<128x384xf32, #tpu.memory_space<vmem>>, vector<128x384xf32>
      %cst_38 = arith.constant dense<0.000000e+00> : vector<8x384xf32>
      %53 = tpu.matmul %51, %52, %cst_38 {dimension_numbers = #tpu.dot_dimension_numbers<[1], [0], [0], [1], [0, 0, 1, 1], [], []>} : vector<8x128xf32>, vector<128x384xf32>, vector<8x384xf32> -> vector<8x384xf32>
      %c0_39 = arith.constant 0 : index
      %c0_40 = arith.constant 0 : index
      %54 = vector.load %arg9[%c0_39, %c0_40] : memref<1x384xf32, #tpu.memory_space<vmem>>, vector<1x384xf32>
      %55 = vector.broadcast %54 : vector<1x384xf32> to vector<8x384xf32>
      %56 = arith.addf %53, %55 : vector<8x384xf32>
      %c0_41 = arith.constant 0 : index
      %57 = memref.load %arg1[%c0_41] : memref<8xi32, #tpu.memory_space<smem>>
      %c0_i32_42 = arith.constant 0 : i32
      %c0_i32_43 = arith.constant 0 : i32
      %58 = tpu.memref_slice %arg2[%57, %c0_i32_43] : memref<512x128xf32, #tpu.memory_space<any>> -> memref<1x128xf32, #tpu.memory_space<any>>
      %c0_i32_44 = arith.constant 0 : i32
      %c0_i32_45 = arith.constant 0 : i32
      %59 = tpu.memref_slice %arg19[%c0_i32_44, %c0_i32_45] : memref<8x128xf32, #tpu.memory_space<vmem>> -> memref<1x128xf32, #tpu.memory_space<vmem>>
      %60 = tpu.memref_slice %arg20[%c0_i32_42] : memref<8x!tpu.dma_semaphore, #tpu.memory_space<semaphore_mem>> -> memref<1x!tpu.dma_semaphore, #tpu.memory_space<semaphore_mem>>
      %61 = tpu.memref_squeeze %60 : memref<1x!tpu.dma_semaphore, #tpu.memory_space<semaphore_mem>> -> memref<!tpu.dma_semaphore, #tpu.memory_space<semaphore_mem>>
      tpu.wait_dma2 semaphore(%61 : memref<!tpu.dma_semaphore, #tpu.memory_space<semaphore_mem>>) src(%58 : memref<1x128xf32, #tpu.memory_space<any>>) dst(%59 : memref<1x128xf32, #tpu.memory_space<vmem>>)
      %c1_46 = arith.constant 1 : index
      %62 = memref.load %arg1[%c1_46] : memref<8xi32, #tpu.memory_space<smem>>
      %c1_i32_47 = arith.constant 1 : i32
      %c0_i32_48 = arith.constant 0 : i32
      %63 = tpu.memref_slice %arg2[%62, %c0_i32_48] : memref<512x128xf32, #tpu.memory_space<any>> -> memref<1x128xf32, #tpu.memory_space<any>>
      %c1_i32_49 = arith.constant 1 : i32
      %c0_i32_50 = arith.constant 0 : i32
      %64 = tpu.memref_slice %arg19[%c1_i32_49, %c0_i32_50] : memref<8x128xf32, #tpu.memory_space<vmem>> -> memref<1x128xf32, #tpu.memory_space<vmem>>
      %65 = tpu.memref_slice %arg20[%c1_i32_47] : memref<8x!tpu.dma_semaphore, #tpu.memory_space<semaphore_mem>> -> memref<1x!tpu.dma_semaphore, #tpu.memory_space<semaphore_mem>>
      %66 = tpu.memref_squeeze %65 : memref<1x!tpu.dma_semaphore, #tpu.memory_space<semaphore_mem>> -> memref<!tpu.dma_semaphore, #tpu.memory_space<semaphore_mem>>
      tpu.wait_dma2 semaphore(%66 : memref<!tpu.dma_semaphore, #tpu.memory_space<semaphore_mem>>) src(%63 : memref<1x128xf32, #tpu.memory_space<any>>) dst(%64 : memref<1x128xf32, #tpu.memory_space<vmem>>)
      %c2_51 = arith.constant 2 : index
      %67 = memref.load %arg1[%c2_51] : memref<8xi32, #tpu.memory_space<smem>>
      %c2_i32_52 = arith.constant 2 : i32
      %c0_i32_53 = arith.constant 0 : i32
      %68 = tpu.memref_slice %arg2[%67, %c0_i32_53] : memref<512x128xf32, #tpu.memory_space<any>> -> memref<1x128xf32, #tpu.memory_space<any>>
      %c2_i32_54 = arith.constant 2 : i32
      %c0_i32_55 = arith.constant 0 : i32
      %69 = tpu.memref_slice %arg19[%c2_i32_54, %c0_i32_55] : memref<8x128xf32, #tpu.memory_space<vmem>> -> memref<1x128xf32, #tpu.memory_space<vmem>>
      %70 = tpu.memref_slice %arg20[%c2_i32_52] : memref<8x!tpu.dma_semaphore, #tpu.memory_space<semaphore_mem>> -> memref<1x!tpu.dma_semaphore, #tpu.memory_space<semaphore_mem>>
      %71 = tpu.memref_squeeze %70 : memref<1x!tpu.dma_semaphore, #tpu.memory_space<semaphore_mem>> -> memref<!tpu.dma_semaphore, #tpu.memory_space<semaphore_mem>>
      tpu.wait_dma2 semaphore(%71 : memref<!tpu.dma_semaphore, #tpu.memory_space<semaphore_mem>>) src(%68 : memref<1x128xf32, #tpu.memory_space<any>>) dst(%69 : memref<1x128xf32, #tpu.memory_space<vmem>>)
      %c3_56 = arith.constant 3 : index
      %72 = memref.load %arg1[%c3_56] : memref<8xi32, #tpu.memory_space<smem>>
      %c3_i32_57 = arith.constant 3 : i32
      %c0_i32_58 = arith.constant 0 : i32
      %73 = tpu.memref_slice %arg2[%72, %c0_i32_58] : memref<512x128xf32, #tpu.memory_space<any>> -> memref<1x128xf32, #tpu.memory_space<any>>
      %c3_i32_59 = arith.constant 3 : i32
      %c0_i32_60 = arith.constant 0 : i32
      %74 = tpu.memref_slice %arg19[%c3_i32_59, %c0_i32_60] : memref<8x128xf32, #tpu.memory_space<vmem>> -> memref<1x128xf32, #tpu.memory_space<vmem>>
      %75 = tpu.memref_slice %arg20[%c3_i32_57] : memref<8x!tpu.dma_semaphore, #tpu.memory_space<semaphore_mem>> -> memref<1x!tpu.dma_semaphore, #tpu.memory_space<semaphore_mem>>
      %76 = tpu.memref_squeeze %75 : memref<1x!tpu.dma_semaphore, #tpu.memory_space<semaphore_mem>> -> memref<!tpu.dma_semaphore, #tpu.memory_space<semaphore_mem>>
      tpu.wait_dma2 semaphore(%76 : memref<!tpu.dma_semaphore, #tpu.memory_space<semaphore_mem>>) src(%73 : memref<1x128xf32, #tpu.memory_space<any>>) dst(%74 : memref<1x128xf32, #tpu.memory_space<vmem>>)
      %c4_61 = arith.constant 4 : index
      %77 = memref.load %arg1[%c4_61] : memref<8xi32, #tpu.memory_space<smem>>
      %c4_i32_62 = arith.constant 4 : i32
      %c0_i32_63 = arith.constant 0 : i32
      %78 = tpu.memref_slice %arg2[%77, %c0_i32_63] : memref<512x128xf32, #tpu.memory_space<any>> -> memref<1x128xf32, #tpu.memory_space<any>>
      %c4_i32_64 = arith.constant 4 : i32
      %c0_i32_65 = arith.constant 0 : i32
      %79 = tpu.memref_slice %arg19[%c4_i32_64, %c0_i32_65] : memref<8x128xf32, #tpu.memory_space<vmem>> -> memref<1x128xf32, #tpu.memory_space<vmem>>
      %80 = tpu.memref_slice %arg20[%c4_i32_62] : memref<8x!tpu.dma_semaphore, #tpu.memory_space<semaphore_mem>> -> memref<1x!tpu.dma_semaphore, #tpu.memory_space<semaphore_mem>>
      %81 = tpu.memref_squeeze %80 : memref<1x!tpu.dma_semaphore, #tpu.memory_space<semaphore_mem>> -> memref<!tpu.dma_semaphore, #tpu.memory_space<semaphore_mem>>
      tpu.wait_dma2 semaphore(%81 : memref<!tpu.dma_semaphore, #tpu.memory_space<semaphore_mem>>) src(%78 : memref<1x128xf32, #tpu.memory_space<any>>) dst(%79 : memref<1x128xf32, #tpu.memory_space<vmem>>)
      %c5_66 = arith.constant 5 : index
      %82 = memref.load %arg1[%c5_66] : memref<8xi32, #tpu.memory_space<smem>>
      %c5_i32_67 = arith.constant 5 : i32
      %c0_i32_68 = arith.constant 0 : i32
      %83 = tpu.memref_slice %arg2[%82, %c0_i32_68] : memref<512x128xf32, #tpu.memory_space<any>> -> memref<1x128xf32, #tpu.memory_space<any>>
      %c5_i32_69 = arith.constant 5 : i32
      %c0_i32_70 = arith.constant 0 : i32
      %84 = tpu.memref_slice %arg19[%c5_i32_69, %c0_i32_70] : memref<8x128xf32, #tpu.memory_space<vmem>> -> memref<1x128xf32, #tpu.memory_space<vmem>>
      %85 = tpu.memref_slice %arg20[%c5_i32_67] : memref<8x!tpu.dma_semaphore, #tpu.memory_space<semaphore_mem>> -> memref<1x!tpu.dma_semaphore, #tpu.memory_space<semaphore_mem>>
      %86 = tpu.memref_squeeze %85 : memref<1x!tpu.dma_semaphore, #tpu.memory_space<semaphore_mem>> -> memref<!tpu.dma_semaphore, #tpu.memory_space<semaphore_mem>>
      tpu.wait_dma2 semaphore(%86 : memref<!tpu.dma_semaphore, #tpu.memory_space<semaphore_mem>>) src(%83 : memref<1x128xf32, #tpu.memory_space<any>>) dst(%84 : memref<1x128xf32, #tpu.memory_space<vmem>>)
      %c6_71 = arith.constant 6 : index
      %87 = memref.load %arg1[%c6_71] : memref<8xi32, #tpu.memory_space<smem>>
      %c6_i32_72 = arith.constant 6 : i32
      %c0_i32_73 = arith.constant 0 : i32
      %88 = tpu.memref_slice %arg2[%87, %c0_i32_73] : memref<512x128xf32, #tpu.memory_space<any>> -> memref<1x128xf32, #tpu.memory_space<any>>
      %c6_i32_74 = arith.constant 6 : i32
      %c0_i32_75 = arith.constant 0 : i32
      %89 = tpu.memref_slice %arg19[%c6_i32_74, %c0_i32_75] : memref<8x128xf32, #tpu.memory_space<vmem>> -> memref<1x128xf32, #tpu.memory_space<vmem>>
      %90 = tpu.memref_slice %arg20[%c6_i32_72] : memref<8x!tpu.dma_semaphore, #tpu.memory_space<semaphore_mem>> -> memref<1x!tpu.dma_semaphore, #tpu.memory_space<semaphore_mem>>
      %91 = tpu.memref_squeeze %90 : memref<1x!tpu.dma_semaphore, #tpu.memory_space<semaphore_mem>> -> memref<!tpu.dma_semaphore, #tpu.memory_space<semaphore_mem>>
      tpu.wait_dma2 semaphore(%91 : memref<!tpu.dma_semaphore, #tpu.memory_space<semaphore_mem>>) src(%88 : memref<1x128xf32, #tpu.memory_space<any>>) dst(%89 : memref<1x128xf32, #tpu.memory_space<vmem>>)
      %c7_76 = arith.constant 7 : index
      %92 = memref.load %arg1[%c7_76] : memref<8xi32, #tpu.memory_space<smem>>
      %c7_i32_77 = arith.constant 7 : i32
      %c0_i32_78 = arith.constant 0 : i32
      %93 = tpu.memref_slice %arg2[%92, %c0_i32_78] : memref<512x128xf32, #tpu.memory_space<any>> -> memref<1x128xf32, #tpu.memory_space<any>>
      %c7_i32_79 = arith.constant 7 : i32
      %c0_i32_80 = arith.constant 0 : i32
      %94 = tpu.memref_slice %arg19[%c7_i32_79, %c0_i32_80] : memref<8x128xf32, #tpu.memory_space<vmem>> -> memref<1x128xf32, #tpu.memory_space<vmem>>
      %95 = tpu.memref_slice %arg20[%c7_i32_77] : memref<8x!tpu.dma_semaphore, #tpu.memory_space<semaphore_mem>> -> memref<1x!tpu.dma_semaphore, #tpu.memory_space<semaphore_mem>>
      %96 = tpu.memref_squeeze %95 : memref<1x!tpu.dma_semaphore, #tpu.memory_space<semaphore_mem>> -> memref<!tpu.dma_semaphore, #tpu.memory_space<semaphore_mem>>
      tpu.wait_dma2 semaphore(%96 : memref<!tpu.dma_semaphore, #tpu.memory_space<semaphore_mem>>) src(%93 : memref<1x128xf32, #tpu.memory_space<any>>) dst(%94 : memref<1x128xf32, #tpu.memory_space<vmem>>)
      %c0_81 = arith.constant 0 : index
      %c0_82 = arith.constant 0 : index
      %97 = vector.load %arg19[%c0_81, %c0_82] : memref<8x128xf32, #tpu.memory_space<vmem>>, vector<8x128xf32>
      %c0_83 = arith.constant 0 : index
      %c0_84 = arith.constant 0 : index
      %98 = vector.load %arg6[%c0_83, %c0_84] : memref<128x384xf32, #tpu.memory_space<vmem>>, vector<128x384xf32>
      %cst_85 = arith.constant dense<0.000000e+00> : vector<8x384xf32>
      %99 = tpu.matmul %97, %98, %cst_85 {dimension_numbers = #tpu.dot_dimension_numbers<[1], [0], [0], [1], [0, 0, 1, 1], [], []>} : vector<8x128xf32>, vector<128x384xf32>, vector<8x384xf32> -> vector<8x384xf32>
      %c0_86 = arith.constant 0 : index
      %c0_87 = arith.constant 0 : index
      %100 = vector.load %arg8[%c0_86, %c0_87] : memref<1x384xf32, #tpu.memory_space<vmem>>, vector<1x384xf32>
      %101 = vector.broadcast %100 : vector<1x384xf32> to vector<8x384xf32>
      %102 = arith.addf %99, %101 : vector<8x384xf32>
      %103 = vector.extract_strided_slice %102 {offsets = [0, 0], sizes = [8, 128], strides = [1, 1]} : vector<8x384xf32> to vector<8x128xf32>
      %104 = vector.extract_strided_slice %56 {offsets = [0, 0], sizes = [8, 128], strides = [1, 1]} : vector<8x384xf32> to vector<8x128xf32>
      %105 = arith.addf %103, %104 : vector<8x128xf32>
      %106 = arith.negf %105 : vector<8x128xf32>
      %107 = math.exp %106 : vector<8x128xf32>
      %cst_88 = arith.constant 1.000000e+00 : f32
      %108 = vector.broadcast %cst_88 : f32 to vector<8x128xf32>
      %109 = arith.addf %108, %107 : vector<8x128xf32>
      %110 = arith.divf %108, %109 : vector<8x128xf32>
      %111 = vector.extract_strided_slice %102 {offsets = [0, 128], sizes = [8, 128], strides = [1, 1]} : vector<8x384xf32> to vector<8x128xf32>
      %112 = vector.extract_strided_slice %56 {offsets = [0, 128], sizes = [8, 128], strides = [1, 1]} : vector<8x384xf32> to vector<8x128xf32>
      %113 = arith.addf %111, %112 : vector<8x128xf32>
      %114 = arith.negf %113 : vector<8x128xf32>
      %115 = math.exp %114 : vector<8x128xf32>
      %cst_89 = arith.constant 1.000000e+00 : f32
      %116 = vector.broadcast %cst_89 : f32 to vector<8x128xf32>
      %117 = arith.addf %116, %115 : vector<8x128xf32>
      %118 = arith.divf %116, %117 : vector<8x128xf32>
      %119 = vector.extract_strided_slice %102 {offsets = [0, 256], sizes = [8, 128], strides = [1, 1]} : vector<8x384xf32> to vector<8x128xf32>
      %120 = vector.extract_strided_slice %56 {offsets = [0, 256], sizes = [8, 128], strides = [1, 1]} : vector<8x384xf32> to vector<8x128xf32>
      %121 = arith.mulf %110, %120 : vector<8x128xf32>
      %122 = arith.addf %119, %121 : vector<8x128xf32>
      %123 = math.tanh %122 : vector<8x128xf32>
      %cst_90 = arith.constant 1.000000e+00 : f32
      %124 = vector.broadcast %cst_90 : f32 to vector<8x128xf32>
      %125 = arith.subf %124, %118 : vector<8x128xf32>
      %126 = arith.mulf %125, %123 : vector<8x128xf32>
      %127 = arith.mulf %118, %51 : vector<8x128xf32>
      %128 = arith.addf %126, %127 : vector<8x128xf32>
      %c0_91 = arith.constant 0 : index
      %c0_92 = arith.constant 0 : index
      %129 = vector.load %arg10[%c0_91, %c0_92] : memref<128x128xf32, #tpu.memory_space<vmem>>, vector<128x128xf32>
      %cst_93 = arith.constant dense<0.000000e+00> : vector<8x128xf32>
      %130 = tpu.matmul %128, %129, %cst_93 {dimension_numbers = #tpu.dot_dimension_numbers<[1], [0], [0], [1], [0, 0, 1, 1], [], []>} : vector<8x128xf32>, vector<128x128xf32>, vector<8x128xf32> -> vector<8x128xf32>
      %c0_94 = arith.constant 0 : index
      %c0_95 = arith.constant 0 : index
      %131 = vector.load %arg11[%c0_94, %c0_95] : memref<1x128xf32, #tpu.memory_space<vmem>>, vector<1x128xf32>
      %132 = vector.broadcast %131 : vector<1x128xf32> to vector<8x128xf32>
      %133 = arith.addf %130, %132 : vector<8x128xf32>
      %134 = vector.shape_cast %133 : vector<8x128xf32> to vector<8x1x128xf32>
      %c0_96 = arith.constant 0 : index
      %c0_97 = arith.constant 0 : index
      %c0_98 = arith.constant 0 : index
      %135 = vector.load %arg5[%c0_96, %c0_97, %c0_98] : memref<8x16x128xf32, #tpu.memory_space<vmem>>, vector<8x16x128xf32>
      %136 = vector.broadcast %134 : vector<8x1x128xf32> to vector<8x16x128xf32>
      %137 = arith.addf %136, %135 : vector<8x16x128xf32>
      %138 = math.tanh %137 : vector<8x16x128xf32>
      %c0_99 = arith.constant 0 : index
      %c0_100 = arith.constant 0 : index
      %139 = vector.load %arg12[%c0_99, %c0_100] : memref<1x128xf32, #tpu.memory_space<vmem>>, vector<1x128xf32>
      %140 = vector.shape_cast %139 : vector<1x128xf32> to vector<1x1x128xf32>
      %141 = vector.broadcast %140 : vector<1x1x128xf32> to vector<8x16x128xf32>
      %142 = arith.mulf %138, %141 : vector<8x16x128xf32>
      %cst_101 = arith.constant dense<0.000000e+00> : vector<8x16xf32>
      %143 = vector.multi_reduction <add>, %142, %cst_101 [2] : vector<8x16x128xf32> to vector<8x16xf32>
      %144 = tpu.iota {dimensions = array<i32: 1>} : vector<8x16xi32>
      %c10_i32 = arith.constant 10 : i32
      %145 = vector.broadcast %c10_i32 : i32 to vector<8x16xi32>
      %146 = arith.cmpi slt, %144, %145 : vector<8x16xi32>
      %cst_102 = arith.constant -1.000000e+30 : f32
      %147 = vector.broadcast %cst_102 : f32 to vector<8x16xf32>
      %148 = arith.select %146, %143, %147 : vector<8x16xi1>, vector<8x16xf32>
      %cst_103 = arith.constant dense<0xFF800000> : vector<8xf32>
      %149 = vector.multi_reduction <maximumf>, %148, %cst_103 [1] : vector<8x16xf32> to vector<8xf32>
      %150 = vector.shape_cast %149 : vector<8xf32> to vector<8x1xf32>
      %151 = vector.broadcast %150 : vector<8x1xf32> to vector<8x16xf32>
      %152 = arith.subf %148, %151 : vector<8x16xf32>
      %153 = math.exp %152 : vector<8x16xf32>
      %cst_104 = arith.constant dense<0.000000e+00> : vector<8xf32>
      %154 = vector.multi_reduction <add>, %153, %cst_104 [1] : vector<8x16xf32> to vector<8xf32>
      %155 = vector.shape_cast %154 : vector<8xf32> to vector<8x1xf32>
      %156 = vector.broadcast %155 : vector<8x1xf32> to vector<8x16xf32>
      %157 = arith.divf %153, %156 : vector<8x16xf32>
      %158 = vector.shape_cast %157 : vector<8x16xf32> to vector<8x16x1xf32>
      %c0_105 = arith.constant 0 : index
      %c0_106 = arith.constant 0 : index
      %c0_107 = arith.constant 0 : index
      %159 = vector.load %arg4[%c0_105, %c0_106, %c0_107] : memref<8x16x128xf32, #tpu.memory_space<vmem>>, vector<8x16x128xf32>
      %160 = vector.broadcast %158 : vector<8x16x1xf32> to vector<8x16x128xf32>
      %161 = arith.mulf %160, %159 : vector<8x16x128xf32>
      %cst_108 = arith.constant dense<0.000000e+00> : vector<8x128xf32>
      %162 = vector.multi_reduction <add>, %161, %cst_108 [1] : vector<8x16x128xf32> to vector<8x128xf32>
      %c0_109 = arith.constant 0 : index
      %c0_110 = arith.constant 0 : index
      %163 = vector.load %arg15[%c0_109, %c0_110] : memref<8x128xf32, #tpu.memory_space<vmem>>, vector<8x128xf32>
      tpu.vector_store %arg15[%c0_109, %c0_110], %128 {strides = array<i32>} : memref<8x128xf32, #tpu.memory_space<vmem>>, vector<8x128xf32>,
      %c0_111 = arith.constant 0 : index
      %c0_112 = arith.constant 0 : index
      %164 = vector.load %arg16[%c0_111, %c0_112] : memref<8x16xf32, #tpu.memory_space<vmem>>, vector<8x16xf32>
      tpu.vector_store %arg16[%c0_111, %c0_112], %157 {strides = array<i32>} : memref<8x16xf32, #tpu.memory_space<vmem>>, vector<8x16xf32>,
      %c0_113 = arith.constant 0 : index
      %c0_114 = arith.constant 0 : index
      %165 = vector.load %arg18[%c0_113, %c0_114] : memref<8x256xf32, #tpu.memory_space<vmem>>, vector<8x128xf32>
      tpu.vector_store %arg18[%c0_113, %c0_114], %128 {strides = array<i32>} : memref<8x256xf32, #tpu.memory_space<vmem>>, vector<8x128xf32>,
      %c0_115 = arith.constant 0 : index
      %c128 = arith.constant 128 : index
      %166 = vector.load %arg18[%c0_115, %c128] : memref<8x256xf32, #tpu.memory_space<vmem>>, vector<8x128xf32>
      tpu.vector_store %arg18[%c0_115, %c128], %162 {strides = array<i32>} : memref<8x256xf32, #tpu.memory_space<vmem>>, vector<8x128xf32>,
    } else {
    }
    %c0 = arith.constant 0 : index
    %c0_1 = arith.constant 0 : index
    %3 = vector.load %arg18[%c0, %c0_1] : memref<8x256xf32, #tpu.memory_space<vmem>>, vector<8x256xf32>
    %4 = arith.truncf %3 : vector<8x256xf32> to vector<8x256xbf16>
    %c0_2 = arith.constant 0 : index
    %c0_3 = arith.constant 0 : index
    %5 = vector.load %arg13[%c0_2, %c0_3] : memref<256x256xbf16, #tpu.memory_space<vmem>>, vector<256x256xbf16>
    %cst = arith.constant dense<0.000000e+00> : vector<8x256xf32>
    %6 = tpu.matmul %4, %5, %cst {dimension_numbers = #tpu.dot_dimension_numbers<[1], [0], [0], [1], [0, 0, 1, 1], [], []>} : vector<8x256xbf16>, vector<256x256xbf16>, vector<8x256xf32> -> vector<8x256xf32>
    %c0_4 = arith.constant 0 : index
    %c0_5 = arith.constant 0 : index
    %7 = vector.load %arg14[%c0_4, %c0_5] : memref<1x256xf32, #tpu.memory_space<vmem>>, vector<1x256xf32>
    %8 = vector.broadcast %7 : vector<1x256xf32> to vector<8x256xf32>
    %9 = arith.addf %6, %8 : vector<8x256xf32>
    %c0_6 = arith.constant 0 : index
    %c0_7 = arith.constant 0 : index
    %10 = vector.load %arg17[%c0_6, %c0_7] : memref<8x256xf32, #tpu.memory_space<vmem>>, vector<8x256xf32>
    tpu.vector_store %arg17[%c0_6, %c0_7], %9 {strides = array<i32>} : memref<8x256xf32, #tpu.memory_space<vmem>>, vector<8x256xf32>,
    return
  }
  func.func @transform_0(%arg0: i32) -> i32 {
    %c0_i32 = arith.constant 0 : i32
    %c0_i32_0 = arith.constant 0 : i32
    return %c0_i32 : i32
  }
  func.func @transform_2(%arg0: i32) -> (i32, i32) {
    %c0_i32 = arith.constant 0 : i32
    %c0_i32_0 = arith.constant 0 : i32
    %c0_i32_1 = arith.constant 0 : i32
    return %c0_i32, %c0_i32_0 : i32, i32
  }
  func.func @transform_3(%arg0: i32) -> (i32, i32, i32) {
    %c0_i32 = arith.constant 0 : i32
    %c0_i32_0 = arith.constant 0 : i32
    %c0_i32_1 = arith.constant 0 : i32
    %c0_i32_2 = arith.constant 0 : i32
    return %c0_i32, %c0_i32_0, %c0_i32_1 : i32, i32, i32
  }
  func.func @transform_4(%arg0: i32) -> (i32, i32, i32) {
    %c0_i32 = arith.constant 0 : i32
    %c0_i32_0 = arith.constant 0 : i32
    %c0_i32_1 = arith.constant 0 : i32
    %c0_i32_2 = arith.constant 0 : i32
    return %c0_i32, %c0_i32_0, %c0_i32_1 : i32, i32, i32
  }
  func.func @transform_5(%arg0: i32) -> (i32, i32) {
    %c0_i32 = arith.constant 0 : i32
    %c0_i32_0 = arith.constant 0 : i32
    %c0_i32_1 = arith.constant 0 : i32
    return %c0_i32, %c0_i32_0 : i32, i32
  }
  func.func @transform_6(%arg0: i32) -> (i32, i32) {
    %c0_i32 = arith.constant 0 : i32
    %c0_i32_0 = arith.constant 0 : i32
    %c0_i32_1 = arith.constant 0 : i32
    return %c0_i32, %c0_i32_0 : i32, i32
  }
  func.func @transform_7(%arg0: i32) -> (i32, i32) {
    %c0_i32 = arith.constant 0 : i32
    %c0_i32_0 = arith.constant 0 : i32
    %c0_i32_1 = arith.constant 0 : i32
    return %c0_i32, %c0_i32_0 : i32, i32
  }
  func.func @transform_8(%arg0: i32) -> (i32, i32) {
    %c0_i32 = arith.constant 0 : i32
    %c0_i32_0 = arith.constant 0 : i32
    %c0_i32_1 = arith.constant 0 : i32
    return %c0_i32, %c0_i32_0 : i32, i32
  }
  func.func @transform_9(%arg0: i32) -> (i32, i32) {
    %c0_i32 = arith.constant 0 : i32
    %c0_i32_0 = arith.constant 0 : i32
    %c0_i32_1 = arith.constant 0 : i32
    return %c0_i32, %c0_i32_0 : i32, i32
  }
  func.func @transform_10(%arg0: i32) -> (i32, i32) {
    %c0_i32 = arith.constant 0 : i32
    %c0_i32_0 = arith.constant 0 : i32
    %c0_i32_1 = arith.constant 0 : i32
    return %c0_i32, %c0_i32_0 : i32, i32
  }
  func.func @transform_11(%arg0: i32) -> (i32, i32) {
    %c0_i32 = arith.constant 0 : i32
    %c0_i32_0 = arith.constant 0 : i32
    %c0_i32_1 = arith.constant 0 : i32
    return %c0_i32, %c0_i32_0 : i32, i32
  }
  func.func @transform_12(%arg0: i32) -> (i32, i32) {
    %c0_i32 = arith.constant 0 : i32
    %c0_i32_0 = arith.constant 0 : i32
    return %c0_i32, %arg0 : i32, i32
  }
  func.func @transform_13(%arg0: i32) -> (i32, i32) {
    %c0_i32 = arith.constant 0 : i32
    %c0_i32_0 = arith.constant 0 : i32
    return %c0_i32, %arg0 : i32, i32
  }
  func.func @transform_14(%arg0: i32) -> (i32, i32) {
    %c0_i32 = arith.constant 0 : i32
    %c0_i32_0 = arith.constant 0 : i32
    %c0_i32_1 = arith.constant 0 : i32
    return %c0_i32, %c0_i32_0 : i32, i32
  }
  func.func @transform_15(%arg0: i32) -> (i32, i32) {
    %c0_i32 = arith.constant 0 : i32
    %c0_i32_0 = arith.constant 0 : i32
    %c0_i32_1 = arith.constant 0 : i32
    return %c0_i32, %c0_i32_0 : i32, i32
  }
  func.func @transform_16(%arg0: i32) -> (i32, i32) {
    %c0_i32 = arith.constant 0 : i32
    %c0_i32_0 = arith.constant 0 : i32
    return %c0_i32, %arg0 : i32, i32
  }
}

</mosaic_0001>

<llo_original>
// kernel: tpu_custom_call.1
$region0: #{tpu_custom_call.1}
  #allocation0 [shape = 'u32[]', space=smem, size = 0x4, offset = 0x4, fixed_abs, tag = 'smem constant byte address 0x4 - core index']
  #allocation1 [shape = 'u32[144,128]{1,0:T(1,128)}', space=vmem, size = 0x12000, scoped, tag = 'internal scratch']
  #allocation2 [shape = 'f32[8,256]{1,0:T(8,128)}', space=vmem, size = 0x2000, scoped, tag = 'scratch operand']
  #allocation3 [shape = 'f32[8,128]{1,0:T(8,128)}', space=vmem, size = 0x1000, scoped, tag = 'scratch operand']
  #allocation4 [shape = 's32[8]{0}', space=sflag, size = 0x20, scoped, tag = 'scratch operand']
  #allocation23 [shape = 's32[]', space=sflag, size = 0x4, offset = 0, fixed_abs, tag = 'sflag constant byte address 0x0 - dummy sync flag']
  #allocation24 [shape = 's32[]', space=sflag, size = 0x4, offset = 0, fixed_abs, tag = 'sflag constant byte address 0x0 - dummy sync flag']
  #allocation25 [shape = 'u32[]', space=smem, size = 0x4, offset = 0x44, fixed_abs, tag = 'smem constant byte address 0x44 - assertion arg 0']
  #allocation26 [shape = 'u32[]', space=smem, size = 0x4, offset = 0x48, fixed_abs, tag = 'smem constant byte address 0x48 - assertion arg 1']
  #allocation27 [shape = 's32[]', space=sflag, size = 0x4, offset = 0, fixed_abs, tag = 'sflag constant byte address 0x0 - dummy sync flag']
  #allocation28 [shape = 's32[]', space=sflag, size = 0x4, offset = 0, fixed_abs, tag = 'sflag constant byte address 0x0 - dummy sync flag']
  #allocation29 [shape = 's32[]', space=sflag, size = 0x4, offset = 0, fixed_abs, tag = 'sflag constant byte address 0x0 - dummy sync flag']
  #allocation30 [shape = 's32[]', space=sflag, size = 0x4, offset = 0, fixed_abs, tag = 'sflag constant byte address 0x0 - dummy sync flag']
  #allocation31 [shape = 's32[]', space=sflag, size = 0x4, offset = 0, fixed_abs, tag = 'sflag constant byte address 0x0 - dummy sync flag']
  #allocation32 [shape = 's32[]', space=sflag, size = 0x4, offset = 0, fixed_abs, tag = 'sflag constant byte address 0x0 - dummy sync flag']
  #allocation33 [shape = 's32[]', space=sflag, size = 0x4, offset = 0, fixed_abs, tag = 'sflag constant byte address 0x0 - dummy sync flag']
  #allocation34 [shape = 's32[]', space=sflag, size = 0x4, offset = 0, fixed_abs, tag = 'sflag constant byte address 0x0 - dummy sync flag']
  #allocation35 [shape = 's32[]', space=sflag, size = 0x4, offset = 0, fixed_abs, tag = 'sflag constant byte address 0x0 - dummy sync flag']
  #allocation36 [shape = 's32[]', space=sflag, size = 0x4, offset = 0, fixed_abs, tag = 'sflag constant byte address 0x0 - dummy sync flag']
  #allocation37 [shape = 's32[]', space=sflag, size = 0x4, offset = 0, fixed_abs, tag = 'sflag constant byte address 0x0 - dummy sync flag']
  #allocation38 [shape = 's32[]', space=sflag, size = 0x4, offset = 0, fixed_abs, tag = 'sflag constant byte address 0x0 - dummy sync flag']
  #allocation39 [shape = 's32[]', space=sflag, size = 0x4, offset = 0, fixed_abs, tag = 'sflag constant byte address 0x0 - dummy sync flag']
  #allocation40 [shape = 's32[]', space=sflag, size = 0x4, offset = 0, fixed_abs, tag = 'sflag constant byte address 0x0 - dummy sync flag']
  %s0 = inlined_call_operand.hbm [shape: s32[8], index: 0, kind: input, shape index: {}]
  %s1 = inlined_call_operand.hbm [shape: f32[512,128], index: 1, kind: input, shape index: {}]
  %s2 = inlined_call_operand.hbm [shape: f32[8,128], index: 2, kind: input, shape index: {}]
  %s3 = inlined_call_operand.hbm [shape: f32[8,16,128], index: 3, kind: input, shape index: {}]
  %s4 = inlined_call_operand.hbm [shape: f32[8,16,128], index: 4, kind: input, shape index: {}]
  %s5 = inlined_call_operand.hbm [shape: f32[128,384], index: 5, kind: input, shape index: {}]
  %s6 = inlined_call_operand.hbm [shape: f32[128,384], index: 6, kind: input, shape index: {}]
  %s7 = inlined_call_operand.vmem [shape: f32[1,384], index: 7, kind: input, shape index: {}]
  %s8 = inlined_call_operand.vmem [shape: f32[1,384], index: 8, kind: input, shape index: {}]
  %s9 = inlined_call_operand.hbm [shape: f32[128,128], index: 9, kind: input, shape index: {}]
  %s10 = inlined_call_operand.vmem [shape: f32[1,128], index: 10, kind: input, shape index: {}]
  %s11 = inlined_call_operand.vmem [shape: f32[1,128], index: 11, kind: input, shape index: {}]
  %s12 = inlined_call_operand.hbm [shape: bf16[256,512], index: 12, kind: input, shape index: {}]
  %s13 = inlined_call_operand.vmem [shape: f32[1,512], index: 13, kind: input, shape index: {}]
  %s14 = inlined_call_operand.hbm [shape: f32[8,128], index: 14, kind: output, shape index: {0}]
  %s15 = inlined_call_operand.hbm [shape: f32[8,16], index: 15, kind: output, shape index: {1}]
  %s16 = inlined_call_operand.hbm [shape: f32[8,512], index: 16, kind: output, shape index: {2}]
  %17 = xla_tuple %s14, %s15, %s16
  %s18 = sld [smem:[#allocation0]]
  $region169: #{tpu_custom_call.1} parent=0
    _
  %s20 = ssub.s32 1, %s18
  %s21 = scalar_select 0, %s20, %s18
  $region1: #{tpu_custom_call.1} parent=0
    #allocation5 [shape = 'u8[512]{0}', space=smem, size = 0x200, scoped, tag = 'input window, operand 0, single buffered']
    #allocation6 [shape = 's32[2]{0}', space=sflag, size = 0x8, scoped, tag = 'scoped memory for tpu_custom_call.1']
    #allocation7 [shape = 's32[2]{0}', space=sflag, size = 0x8, scoped, tag = 'scoped memory for tpu_custom_call.1']
    #allocation8 [shape = 's32[2]{0}', space=sflag, size = 0x8, scoped, tag = 'scoped memory for tpu_custom_call.1']
    #allocation9 [shape = 'u8[4096]{0}', space=vmem, size = 0x1000, scoped, tag = 'input window, operand 2, single buffered']
    #allocation10 [shape = 'u8[65536]{0}', space=vmem, size = 0x10000, scoped, tag = 'input window, operand 3, single buffered']
    #allocation11 [shape = 's32[1]{0}', space=sflag, size = 0x4, scoped, tag = 'scoped memory for tpu_custom_call.1']
    #allocation12 [shape = 'u8[65536]{0}', space=vmem, size = 0x10000, scoped, tag = 'input window, operand 4, single buffered']
    #allocation13 [shape = 'u8[196608]{0}', space=vmem, size = 0x30000, scoped, tag = 'input window, operand 5, single buffered']
    #allocation14 [shape = 's32[1]{0}', space=sflag, size = 0x4, scoped, tag = 'scoped memory for tpu_custom_call.1']
    #allocation15 [shape = 'u8[196608]{0}', space=vmem, size = 0x30000, scoped, tag = 'input window, operand 6, single buffered']
    #allocation16 [shape = 'u8[65536]{0}', space=vmem, size = 0x10000, scoped, tag = 'input window, operand 9, single buffered']
    #allocation17 [shape = 's32[1]{0}', space=sflag, size = 0x4, scoped, tag = 'scoped memory for tpu_custom_call.1']
    #allocation18 [shape = 'u8[262144]{0}', space=vmem, size = 0x40000, scoped, tag = 'input window, operand 12']
    #allocation19 [shape = 'u8[4096]{0}', space=vmem, size = 0x1000, scoped, tag = 'output window, operand 0, single buffered']
    #allocation20 [shape = 'u8[4096]{0}', space=vmem, size = 0x1000, scoped, tag = 'output window, operand 1, single buffered']
    #allocation21 [shape = 's32[1]{0}', space=sflag, size = 0x4, scoped, tag = 'scoped memory for tpu_custom_call.1']
    #allocation22 [shape = 'u8[16384]{0}', space=vmem, size = 0x4000, scoped, tag = 'output window, operand 2']
    %22 = vsyncpa [#allocation8], 0
    %23 = vsyncpa [#allocation6], 0
    %24 = vsyncpa [#allocation11], 0
    %25 = vsyncpa [#allocation14], 0
    %26 = vsyncpa [#allocation17], 0
    %27 = vsyncpa [#allocation7], 0
    %28 = vsyncpa [#allocation21], 0
    loop: start=0, step=1, limit=4
    $region2: #{tpu_custom_call.1} parent=1 // loop_pre_header
      _
    $region3: #{tpu_custom_call.1} parent=1 // loop_header
      %s30 = sphi 0, %s34
      %p31 = scmp.ge.s32.totalorder %s30, 4
      %s38 = sphi 0, %s38
      %s40 = sphi 0, %s38
      %s41 = sphi 0, %s40
      %s55 = sphi 0, %s41
      %s59 = sphi 0, %s59
      %s61 = sphi 0, %s59
      %s62 = sphi 0, %s61
      %s76 = sphi 0, %s62
      %s80 = sphi 0, %s80
      %s82 = sphi 0, %s80
      %s83 = sphi 0, %s82
      %s97 = sphi 0, %s83
      %s101 = sphi 0, %s101
      %s103 = sphi 0, %s101
      %s104 = sphi 0, %s103
      %s118 = sphi 0, %s104
      %s122 = sphi 0, %s122
      %s124 = sphi 0, %s122
      %s125 = sphi 0, %s124
      %s139 = sphi 0, %s125
      %s143 = sphi 0, %s143
      %s145 = sphi 0, %s143
      %s146 = sphi 0, %s145
      %s160 = sphi 0, %s146
      %s164 = sphi 0, %s164
      %s166 = sphi 0, %s164
      %s167 = sphi 0, %s166
      %s181 = sphi 0, %s167
      %s185 = sphi 0, %s185
      %s187 = sphi 0, %s185
      %s188 = sphi 0, %s187
      %s202 = sphi 0, %s188
      %s206 = sphi 0, %s206
      %s208 = sphi 0, %s206
      %s209 = sphi 0, %s208
      %s223 = sphi 0, %s209
      %s227 = sphi 0, %s227
      %s229 = sphi 0, %s227
      %s230 = sphi 0, %s229
      %s244 = sphi 0, %s230
      %s248 = sphi 0, %s248
      %s250 = sphi 0, %s248
      %s251 = sphi 0, %s250
      %s265 = sphi 0, %s251
      %s271 = sphi 0, %s273
      %s274 = sphi 0, %s271
      %s275 = sphi 0, %s274
      %s291 = sphi 0, %s275
      %s297 = sphi 0, %s299
      %s300 = sphi 0, %s297
      %s301 = sphi 0, %s300
      %s317 = sphi 0, %s301
      %s321 = sphi 0, %s321
      %s323 = sphi 0, %s321
      %s324 = sphi 0, %s323
      %s338 = sphi 0, %s324
      %s342 = sphi 0, %s342
      %s344 = sphi 0, %s342
      %s345 = sphi 0, %s344
      %s359 = sphi 0, %s345
      %s365 = sphi 0, %s367
      %s368 = sphi 0, %s365
      %s369 = sphi 0, %s368
      %s385 = sphi 0, %s369
    $region4: #{tpu_custom_call.1} parent=1 // loop_header_branch
      %33 = sbr.rel (%p31) target = $region8
    $region5: #{tpu_custom_call.1} parent=1 // loop_body
      %s35 = ssub.s32 %s30, 1
      %s36 = ssub.s32 %s30, 2
      %s37 = sadd.s32 %s30, 1
      %s39 = sadd.s32 %s38, 1
      %p42 = scmp.eq.s32.totalorder %s30, 1
      %p43 = scmp.ne.s32.totalorder %s38, %s40
      %p44 = scmp.eq.s32.totalorder %s30, 0
      %p45 = por %p43, %p44
      %p46 = scmp.ne.s32.totalorder %s38, %s40
      %p47 = scmp.eq.s32.totalorder %s35, 1
      %p48 = por %p46, %p47
      %p49 = scmp.ne.s32.totalorder %s40, %s41
      %p50 = scmp.eq.s32.totalorder %s35, 0
      %p51 = por %p49, %p50
      %p52 = scmp.ne.s32.totalorder %s40, %s41
      %p53 = scmp.eq.s32.totalorder %s36, 1
      %p54 = por %p52, %p53
      %p56 = scmp.ne.s32.totalorder %s41, %s55
      %p57 = scmp.eq.s32.totalorder %s36, 0
      %p58 = por %p56, %p57
      %s60 = sadd.s32 %s59, 1
      %p63 = scmp.eq.s32.totalorder %s30, 1
      %p64 = scmp.ne.s32.totalorder %s59, %s61
      %p65 = scmp.eq.s32.totalorder %s30, 0
      %p66 = por %p64, %p65
      %p67 = scmp.ne.s32.totalorder %s59, %s61
      %p68 = scmp.eq.s32.totalorder %s35, 1
      %p69 = por %p67, %p68
      %p70 = scmp.ne.s32.totalorder %s61, %s62
      %p71 = scmp.eq.s32.totalorder %s35, 0
      %p72 = por %p70, %p71
      %p73 = scmp.ne.s32.totalorder %s61, %s62
      %p74 = scmp.eq.s32.totalorder %s36, 1
      %p75 = por %p73, %p74
      %p77 = scmp.ne.s32.totalorder %s62, %s76
      %p78 = scmp.eq.s32.totalorder %s36, 0
      %p79 = por %p77, %p78
      %s81 = sadd.s32 %s80, 1
      %p84 = scmp.eq.s32.totalorder %s30, 1
      %p85 = scmp.ne.s32.totalorder %s80, %s82
      %p86 = scmp.eq.s32.totalorder %s30, 0
      %p87 = por %p85, %p86
      %p88 = scmp.ne.s32.totalorder %s80, %s82
      %p89 = scmp.eq.s32.totalorder %s35, 1
      %p90 = por %p88, %p89
      %p91 = scmp.ne.s32.totalorder %s82, %s83
      %p92 = scmp.eq.s32.totalorder %s35, 0
      %p93 = por %p91, %p92
      %p94 = scmp.ne.s32.totalorder %s82, %s83
      %p95 = scmp.eq.s32.totalorder %s36, 1
      %p96 = por %p94, %p95
      %p98 = scmp.ne.s32.totalorder %s83, %s97
      %p99 = scmp.eq.s32.totalorder %s36, 0
      %p100 = por %p98, %p99
      %s102 = sadd.s32 %s101, 1
      %p105 = scmp.eq.s32.totalorder %s30, 1
      %p106 = scmp.ne.s32.totalorder %s101, %s103
      %p107 = scmp.eq.s32.totalorder %s30, 0
      %p108 = por %p106, %p107
      %p109 = scmp.ne.s32.totalorder %s101, %s103
      %p110 = scmp.eq.s32.totalorder %s35, 1
      %p111 = por %p109, %p110
      %p112 = scmp.ne.s32.totalorder %s103, %s104
      %p113 = scmp.eq.s32.totalorder %s35, 0
      %p114 = por %p112, %p113
      %p115 = scmp.ne.s32.totalorder %s103, %s104
      %p116 = scmp.eq.s32.totalorder %s36, 1
      %p117 = por %p115, %p116
      %p119 = scmp.ne.s32.totalorder %s104, %s118
      %p120 = scmp.eq.s32.totalorder %s36, 0
      %p121 = por %p119, %p120
      %s123 = sadd.s32 %s122, 1
      %p126 = scmp.eq.s32.totalorder %s30, 1
      %p127 = scmp.ne.s32.totalorder %s122, %s124
      %p128 = scmp.eq.s32.totalorder %s30, 0
      %p129 = por %p127, %p128
      %p130 = scmp.ne.s32.totalorder %s122, %s124
      %p131 = scmp.eq.s32.totalorder %s35, 1
      %p132 = por %p130, %p131
      %p133 = scmp.ne.s32.totalorder %s124, %s125
      %p134 = scmp.eq.s32.totalorder %s35, 0
      %p135 = por %p133, %p134
      %p136 = scmp.ne.s32.totalorder %s124, %s125
      %p137 = scmp.eq.s32.totalorder %s36, 1
      %p138 = por %p136, %p137
      %p140 = scmp.ne.s32.totalorder %s125, %s139
      %p141 = scmp.eq.s32.totalorder %s36, 0
      %p142 = por %p140, %p141
      %s144 = sadd.s32 %s143, 1
      %p147 = scmp.eq.s32.totalorder %s30, 1
      %p148 = scmp.ne.s32.totalorder %s143, %s145
      %p149 = scmp.eq.s32.totalorder %s30, 0
      %p150 = por %p148, %p149
      %p151 = scmp.ne.s32.totalorder %s143, %s145
      %p152 = scmp.eq.s32.totalorder %s35, 1
      %p153 = por %p151, %p152
      %p154 = scmp.ne.s32.totalorder %s145, %s146
      %p155 = scmp.eq.s32.totalorder %s35, 0
      %p156 = por %p154, %p155
      %p157 = scmp.ne.s32.totalorder %s145, %s146
      %p158 = scmp.eq.s32.totalorder %s36, 1
      %p159 = por %p157, %p158
      %p161 = scmp.ne.s32.totalorder %s146, %s160
      %p162 = scmp.eq.s32.totalorder %s36, 0
      %p163 = por %p161, %p162
      %s165 = sadd.s32 %s164, 1
      %p168 = scmp.eq.s32.totalorder %s30, 1
      %p169 = scmp.ne.s32.totalorder %s164, %s166
      %p170 = scmp.eq.s32.totalorder %s30, 0
      %p171 = por %p169, %p170
      %p172 = scmp.ne.s32.totalorder %s164, %s166
      %p173 = scmp.eq.s32.totalorder %s35, 1
      %p174 = por %p172, %p173
      %p175 = scmp.ne.s32.totalorder %s166, %s167
      %p176 = scmp.eq.s32.totalorder %s35, 0
      %p177 = por %p175, %p176
      %p178 = scmp.ne.s32.totalorder %s166, %s167
      %p179 = scmp.eq.s32.totalorder %s36, 1
      %p180 = por %p178, %p179
      %p182 = scmp.ne.s32.totalorder %s167, %s181
      %p183 = scmp.eq.s32.totalorder %s36, 0
      %p184 = por %p182, %p183
      %s186 = sadd.s32 %s185, 1
      %p189 = scmp.eq.s32.totalorder %s30, 1
      %p190 = scmp.ne.s32.totalorder %s185, %s187
      %p191 = scmp.eq.s32.totalorder %s30, 0
      %p192 = por %p190, %p191
      %p193 = scmp.ne.s32.totalorder %s185, %s187
      %p194 = scmp.eq.s32.totalorder %s35, 1
      %p195 = por %p193, %p194
      %p196 = scmp.ne.s32.totalorder %s187, %s188
      %p197 = scmp.eq.s32.totalorder %s35, 0
      %p198 = por %p196, %p197
      %p199 = scmp.ne.s32.totalorder %s187, %s188
      %p200 = scmp.eq.s32.totalorder %s36, 1
      %p201 = por %p199, %p200
      %p203 = scmp.ne.s32.totalorder %s188, %s202
      %p204 = scmp.eq.s32.totalorder %s36, 0
      %p205 = por %p203, %p204
      %s207 = sadd.s32 %s206, 1
      %p210 = scmp.eq.s32.totalorder %s30, 1
      %p211 = scmp.ne.s32.totalorder %s206, %s208
      %p212 = scmp.eq.s32.totalorder %s30, 0
      %p213 = por %p211, %p212
      %p214 = scmp.ne.s32.totalorder %s206, %s208
      %p215 = scmp.eq.s32.totalorder %s35, 1
      %p216 = por %p214, %p215
      %p217 = scmp.ne.s32.totalorder %s208, %s209
      %p218 = scmp.eq.s32.totalorder %s35, 0
      %p219 = por %p217, %p218
      %p220 = scmp.ne.s32.totalorder %s208, %s209
      %p221 = scmp.eq.s32.totalorder %s36, 1
      %p222 = por %p220, %p221
      %p224 = scmp.ne.s32.totalorder %s209, %s223
      %p225 = scmp.eq.s32.totalorder %s36, 0
      %p226 = por %p224, %p225
      %s228 = sadd.s32 %s227, 1
      %p231 = scmp.eq.s32.totalorder %s30, 1
      %p232 = scmp.ne.s32.totalorder %s227, %s229
      %p233 = scmp.eq.s32.totalorder %s30, 0
      %p234 = por %p232, %p233
      %p235 = scmp.ne.s32.totalorder %s227, %s229
      %p236 = scmp.eq.s32.totalorder %s35, 1
      %p237 = por %p235, %p236
      %p238 = scmp.ne.s32.totalorder %s229, %s230
      %p239 = scmp.eq.s32.totalorder %s35, 0
      %p240 = por %p238, %p239
      %p241 = scmp.ne.s32.totalorder %s229, %s230
      %p242 = scmp.eq.s32.totalorder %s36, 1
      %p243 = por %p241, %p242
      %p245 = scmp.ne.s32.totalorder %s230, %s244
      %p246 = scmp.eq.s32.totalorder %s36, 0
      %p247 = por %p245, %p246
      %s249 = sadd.s32 %s248, 1
      %p252 = scmp.eq.s32.totalorder %s30, 1
      %p253 = scmp.ne.s32.totalorder %s248, %s250
      %p254 = scmp.eq.s32.totalorder %s30, 0
      %p255 = por %p253, %p254
      %p256 = scmp.ne.s32.totalorder %s248, %s250
      %p257 = scmp.eq.s32.totalorder %s35, 1
      %p258 = por %p256, %p257
      %p259 = scmp.ne.s32.totalorder %s250, %s251
      %p260 = scmp.eq.s32.totalorder %s35, 0
      %p261 = por %p259, %p260
      %p262 = scmp.ne.s32.totalorder %s250, %s251
      %p263 = scmp.eq.s32.totalorder %s36, 1
      %p264 = por %p262, %p263
      %p266 = scmp.ne.s32.totalorder %s251, %s265
      %p267 = scmp.eq.s32.totalorder %s36, 0
      %p268 = por %p266, %p267
      %s269 = ssub.s32 %s30, %s37
      %p270 = scmp.eq.s32.totalorder %s269, 0
      %s272 = sadd.s32 %s271, 1
      %s273 = scalar_select %p270, %s271, %s272
      %p276 = pneg %p270
      %p277 = scmp.eq.s32.totalorder %s30, 1
      %p278 = por %p276, %p277
      %p279 = scmp.ne.s32.totalorder %s271, %s274
      %p280 = scmp.eq.s32.totalorder %s30, 0
      %p281 = por %p279, %p280
      %p282 = scmp.ne.s32.totalorder %s271, %s274
      %p283 = scmp.eq.s32.totalorder %s35, 1
      %p284 = por %p282, %p283
      %p285 = scmp.ne.s32.totalorder %s274, %s275
      %p286 = scmp.eq.s32.totalorder %s35, 0
      %p287 = por %p285, %p286
      %p288 = scmp.ne.s32.totalorder %s274, %s275
      %p289 = scmp.eq.s32.totalorder %s36, 1
      %p290 = por %p288, %p289
      %p292 = scmp.ne.s32.totalorder %s275, %s291
      %p293 = scmp.eq.s32.totalorder %s36, 0
      %p294 = por %p292, %p293
      %s295 = ssub.s32 %s30, %s37
      %p296 = scmp.eq.s32.totalorder %s295, 0
      %s298 = sadd.s32 %s297, 1
      %s299 = scalar_select %p296, %s297, %s298
      %p302 = pneg %p296
      %p303 = scmp.eq.s32.totalorder %s30, 1
      %p304 = por %p302, %p303
      %p305 = scmp.ne.s32.totalorder %s297, %s300
      %p306 = scmp.eq.s32.totalorder %s30, 0
      %p307 = por %p305, %p306
      %p308 = scmp.ne.s32.totalorder %s297, %s300
      %p309 = scmp.eq.s32.totalorder %s35, 1
      %p310 = por %p308, %p309
      %p311 = scmp.ne.s32.totalorder %s300, %s301
      %p312 = scmp.eq.s32.totalorder %s35, 0
      %p313 = por %p311, %p312
      %p314 = scmp.ne.s32.totalorder %s300, %s301
      %p315 = scmp.eq.s32.totalorder %s36, 1
      %p316 = por %p314, %p315
      %p318 = scmp.ne.s32.totalorder %s301, %s317
      %p319 = scmp.eq.s32.totalorder %s36, 0
      %p320 = por %p318, %p319
      %s322 = sadd.s32 %s321, 1
      %p325 = scmp.eq.s32.totalorder %s30, 1
      %p326 = scmp.ne.s32.totalorder %s321, %s323
      %p327 = scmp.eq.s32.totalorder %s30, 0
      %p328 = por %p326, %p327
      %p329 = scmp.ne.s32.totalorder %s321, %s323
      %p330 = scmp.eq.s32.totalorder %s35, 1
      %p331 = por %p329, %p330
      %p332 = scmp.ne.s32.totalorder %s323, %s324
      %p333 = scmp.eq.s32.totalorder %s35, 0
      %p334 = por %p332, %p333
      %p335 = scmp.ne.s32.totalorder %s323, %s324
      %p336 = scmp.eq.s32.totalorder %s36, 1
      %p337 = por %p335, %p336
      %p339 = scmp.ne.s32.totalorder %s324, %s338
      %p340 = scmp.eq.s32.totalorder %s36, 0
      %p341 = por %p339, %p340
      %s343 = sadd.s32 %s342, 1
      %p346 = scmp.eq.s32.totalorder %s30, 1
      %p347 = scmp.ne.s32.totalorder %s342, %s344
      %p348 = scmp.eq.s32.totalorder %s30, 0
      %p349 = por %p347, %p348
      %p350 = scmp.ne.s32.totalorder %s342, %s344
      %p351 = scmp.eq.s32.totalorder %s35, 1
      %p352 = por %p350, %p351
      %p353 = scmp.ne.s32.totalorder %s344, %s345
      %p354 = scmp.eq.s32.totalorder %s35, 0
      %p355 = por %p353, %p354
      %p356 = scmp.ne.s32.totalorder %s344, %s345
      %p357 = scmp.eq.s32.totalorder %s36, 1
      %p358 = por %p356, %p357
      %p360 = scmp.ne.s32.totalorder %s345, %s359
      %p361 = scmp.eq.s32.totalorder %s36, 0
      %p362 = por %p360, %p361
      %s363 = ssub.s32 %s30, %s37
      %p364 = scmp.eq.s32.totalorder %s363, 0
      %s366 = sadd.s32 %s365, 1
      %s367 = scalar_select %p364, %s365, %s366
      %p370 = pneg %p364
      %p371 = scmp.eq.s32.totalorder %s30, 1
      %p372 = por %p370, %p371
      %p373 = scmp.ne.s32.totalorder %s365, %s368
      %p374 = scmp.eq.s32.totalorder %s30, 0
      %p375 = por %p373, %p374
      %p376 = scmp.ne.s32.totalorder %s365, %s368
      %p377 = scmp.eq.s32.totalorder %s35, 1
      %p378 = por %p376, %p377
      %p379 = scmp.ne.s32.totalorder %s368, %s369
      %p380 = scmp.eq.s32.totalorder %s35, 0
      %p381 = por %p379, %p380
      %p382 = scmp.ne.s32.totalorder %s368, %s369
      %p383 = scmp.eq.s32.totalorder %s36, 1
      %p384 = por %p382, %p383
      %p386 = scmp.ne.s32.totalorder %s369, %s385
      %p387 = scmp.eq.s32.totalorder %s36, 0
      %p388 = por %p386, %p387
      %p389 = scmp.le.s32.totalorder 1, %s30
      %p390 = scmp.lt.s32.totalorder %s30, 3
      %p391 = pnand %p389, %p390
      %p392 = pneg %p391
      // Predicated region
      $region9: #{tpu_custom_call.1} parent=5 // pred_check
        _
      $region10: #{tpu_custom_call.1} parent=5 // pred_check_branch
        %394 = sbr.rel (%p391) target = $region12
      $region11: #{tpu_custom_call.1} parent=5 // pred_region
        %s395 = ssub.s32 %s30, 1
        // Predicated region
        $region13: #{tpu_custom_call.1} parent=11 // pred_check
          %p396 = pneg %p51
        $region14: #{tpu_custom_call.1} parent=11 // pred_check_branch
          %398 = sbr.rel (%p396) target = $region16
        $region15: #{tpu_custom_call.1} parent=11 // pred_region
          %s400 = ssub.s32 16, 16
          %401 = vsyncadd [#allocation8], %s400
          %404 = dma.hbm_to_smem %s0, 16, [#allocation5], [#allocation8]
        $region16: #{tpu_custom_call.1} parent=11 // pred_fallthru
          _
        // Predicated region
        $region17: #{tpu_custom_call.1} parent=11 // pred_check
          %p405 = pneg %p72
        $region18: #{tpu_custom_call.1} parent=11 // pred_check_branch
          %407 = sbr.rel (%p405) target = $region20
        $region19: #{tpu_custom_call.1} parent=11 // pred_region
          %s409 = ssub.s32 128, 128
          %410 = vsyncadd [#allocation6], %s409
          %s412 = sshll.u32 [#allocation9], 4
          %s413 = int_to_ptr.vmem [resolvable:$true] %s412
          %415 = dma.hbm_to_vmem [thread:$0]  %s2, 128, %s413, [#allocation6]
        $region20: #{tpu_custom_call.1} parent=11 // pred_fallthru
          _
        // Predicated region
        $region21: #{tpu_custom_call.1} parent=11 // pred_check
          %p416 = pneg %p93
        $region22: #{tpu_custom_call.1} parent=11 // pred_check_branch
          %418 = sbr.rel (%p416) target = $region24
        $region23: #{tpu_custom_call.1} parent=11 // pred_region
          %s420 = ssub.s32 2048, 2048
          %421 = vsyncadd [#allocation11], %s420
          %s422 = sshll.u32 [#allocation10], 4
          %s423 = int_to_ptr.vmem [resolvable:$true] %s422
          %428 = dma.hbm_to_vmem [thread:$0]  %s3, 2048, %s423, [#allocation11], 128, 128, 8
        $region24: #{tpu_custom_call.1} parent=11 // pred_fallthru
          _
        // Predicated region
        $region25: #{tpu_custom_call.1} parent=11 // pred_check
          %p429 = pneg %p114
        $region26: #{tpu_custom_call.1} parent=11 // pred_check_branch
          %431 = sbr.rel (%p429) target = $region28
        $region27: #{tpu_custom_call.1} parent=11 // pred_region
          %s433 = ssub.s32 2048, 2048
          %434 = vsyncadd [#allocation11], %s433
          %s435 = sshll.u32 [#allocation12], 4
          %s436 = int_to_ptr.vmem [resolvable:$true] %s435
          %441 = dma.hbm_to_vmem [thread:$0]  %s4, 2048, %s436, [#allocation11], 128, 128, 8
        $region28: #{tpu_custom_call.1} parent=11 // pred_fallthru
          _
        // Predicated region
        $region29: #{tpu_custom_call.1} parent=11 // pred_check
          %p442 = pneg %p135
        $region30: #{tpu_custom_call.1} parent=11 // pred_check_branch
          %444 = sbr.rel (%p442) target = $region32
        $region31: #{tpu_custom_call.1} parent=11 // pred_region
          %s446 = ssub.s32 6144, 6144
          %447 = vsyncadd [#allocation14], %s446
          %s448 = sshll.u32 [#allocation13], 4
          %s449 = int_to_ptr.vmem [resolvable:$true] %s448
          %454 = dma.hbm_to_vmem [thread:$0]  %s5, 6144, %s449, [#allocation14], 384, 384, 24
        $region32: #{tpu_custom_call.1} parent=11 // pred_fallthru
          _
        // Predicated region
        $region33: #{tpu_custom_call.1} parent=11 // pred_check
          %p455 = pneg %p156
        $region34: #{tpu_custom_call.1} parent=11 // pred_check_branch
          %457 = sbr.rel (%p455) target = $region36
        $region35: #{tpu_custom_call.1} parent=11 // pred_region
          %s459 = ssub.s32 6144, 6144
          %460 = vsyncadd [#allocation14], %s459
          %s461 = sshll.u32 [#allocation15], 4
          %s462 = int_to_ptr.vmem [resolvable:$true] %s461
          %467 = dma.hbm_to_vmem [thread:$0]  %s6, 6144, %s462, [#allocation14], 384, 384, 24
        $region36: #{tpu_custom_call.1} parent=11 // pred_fallthru
          _
        // Predicated region
        $region37: #{tpu_custom_call.1} parent=11 // pred_check
          %p468 = pneg %p177
        $region38: #{tpu_custom_call.1} parent=11 // pred_check_branch
          %470 = sbr.rel (%p468) target = $region40
        $region39: #{tpu_custom_call.1} parent=11 // pred_region
          _
        $region40: #{tpu_custom_call.1} parent=11 // pred_fallthru
          _
        // Predicated region
        $region41: #{tpu_custom_call.1} parent=11 // pred_check
          %p471 = pneg %p198
        $region42: #{tpu_custom_call.1} parent=11 // pred_check_branch
          %473 = sbr.rel (%p471) target = $region44
        $region43: #{tpu_custom_call.1} parent=11 // pred_region
          _
        $region44: #{tpu_custom_call.1} parent=11 // pred_fallthru
          _
        // Predicated region
        $region45: #{tpu_custom_call.1} parent=11 // pred_check
          %p474 = pneg %p219
        $region46: #{tpu_custom_call.1} parent=11 // pred_check_branch
          %476 = sbr.rel (%p474) target = $region48
        $region47: #{tpu_custom_call.1} parent=11 // pred_region
          %s478 = ssub.s32 2048, 2048
          %479 = vsyncadd [#allocation17], %s478
          %s480 = sshll.u32 [#allocation16], 4
          %s481 = int_to_ptr.vmem [resolvable:$true] %s480
          %486 = dma.hbm_to_vmem [thread:$0]  %s9, 2048, %s481, [#allocation17], 128, 128, 8
        $region48: #{tpu_custom_call.1} parent=11 // pred_fallthru
          _
        // Predicated region
        $region49: #{tpu_custom_call.1} parent=11 // pred_check
          %p487 = pneg %p240
        $region50: #{tpu_custom_call.1} parent=11 // pred_check_branch
          %489 = sbr.rel (%p487) target = $region52
        $region51: #{tpu_custom_call.1} parent=11 // pred_region
          _
        $region52: #{tpu_custom_call.1} parent=11 // pred_fallthru
          _
        // Predicated region
        $region53: #{tpu_custom_call.1} parent=11 // pred_check
          %p490 = pneg %p261
        $region54: #{tpu_custom_call.1} parent=11 // pred_check_branch
          %492 = sbr.rel (%p490) target = $region56
        $region55: #{tpu_custom_call.1} parent=11 // pred_region
          _
        $region56: #{tpu_custom_call.1} parent=11 // pred_fallthru
          _
      $region12: #{tpu_custom_call.1} parent=5 // pred_fallthru
        _
      %p493 = scmp.lt.s32.totalorder %s30, 2
      // Predicated region
      $region57: #{tpu_custom_call.1} parent=5 // pred_check
        %p494 = pneg %p493
      $region58: #{tpu_custom_call.1} parent=5 // pred_check_branch
        %496 = sbr.rel (%p494) target = $region60
      $region59: #{tpu_custom_call.1} parent=5 // pred_region
        // Predicated region
        $region61: #{tpu_custom_call.1} parent=59 // pred_check
          %p497 = pneg %p281
        $region62: #{tpu_custom_call.1} parent=59 // pred_check_branch
          %499 = sbr.rel (%p497) target = $region64
        $region63: #{tpu_custom_call.1} parent=59 // pred_region
          %s500 = sand.u32 %s30, 1
          %s501 = scalar_lea.sflag [#allocation6], %s500
          %s502 = sand.u32 %s271, 1
          %s503 = smul.addr %s502, 256
          %s504 = scalar_lea.vmem [#allocation18], %s503
          %s505 = smul.u32 2, %s30
          %s507 = ssub.s32 4096, 4096
          %508 = vsyncadd %s501, %s507
          %s509 = smul.addr %s505, 64
          %s510 = scalar_lea.hbm %s12, %s509
          %s511 = sshll.u32 %s504, 4
          %s512 = int_to_ptr.vmem [resolvable:$true] %s511
          %517 = dma.hbm_to_vmem [thread:$0]  %s510, 4096, %s512, %s501, 256, 128, 8
        $region64: #{tpu_custom_call.1} parent=59 // pred_fallthru
          _
        // Predicated region
        $region65: #{tpu_custom_call.1} parent=59 // pred_check
          %p518 = pneg %p307
        $region66: #{tpu_custom_call.1} parent=59 // pred_check_branch
          %520 = sbr.rel (%p518) target = $region68
        $region67: #{tpu_custom_call.1} parent=59 // pred_region
          %s521 = smul.u32 2, %s30
          %p522 = scmp.lt.s32.totalorder %s521, 3
          %s523 = scalar_select %p522, %s521, 3
          %s524 = scalar_lea.vmem %s13, %s523
          %s525 = smul.u32 2, %s30
        $region68: #{tpu_custom_call.1} parent=59 // pred_fallthru
          _
      $region60: #{tpu_custom_call.1} parent=5 // pred_fallthru
        _
      %p526 = scmp.le.s32.totalorder 1, %s30
      %p527 = scmp.lt.s32.totalorder %s30, 3
      %p528 = pnand %p526, %p527
      %p529 = pneg %p528
      // Predicated region
      $region69: #{tpu_custom_call.1} parent=5 // pred_check
        _
      $region70: #{tpu_custom_call.1} parent=5 // pred_check_branch
        %531 = sbr.rel (%p528) target = $region72
      $region71: #{tpu_custom_call.1} parent=5 // pred_region
        %s532 = ssub.s32 %s30, 1
        // Predicated region
        $region73: #{tpu_custom_call.1} parent=71 // pred_check
          %p533 = pneg %p51
        $region74: #{tpu_custom_call.1} parent=71 // pred_check_branch
          %535 = sbr.rel (%p533) target = $region76
        $region75: #{tpu_custom_call.1} parent=71 // pred_region
          %536 = dma.done [#allocation8], 16
        $region76: #{tpu_custom_call.1} parent=71 // pred_fallthru
          _
        // Predicated region
        $region77: #{tpu_custom_call.1} parent=71 // pred_check
          %p537 = pneg %p72
        $region78: #{tpu_custom_call.1} parent=71 // pred_check_branch
          %539 = sbr.rel (%p537) target = $region80
        $region79: #{tpu_custom_call.1} parent=71 // pred_region
          %540 = dma.done [#allocation6], 128
        $region80: #{tpu_custom_call.1} parent=71 // pred_fallthru
          _
        // Predicated region
        $region81: #{tpu_custom_call.1} parent=71 // pred_check
          %p541 = pneg %p93
        $region82: #{tpu_custom_call.1} parent=71 // pred_check_branch
          %543 = sbr.rel (%p541) target = $region84
        $region83: #{tpu_custom_call.1} parent=71 // pred_region
          %544 = dma.done [#allocation11], 2048
        $region84: #{tpu_custom_call.1} parent=71 // pred_fallthru
          _
        // Predicated region
        $region85: #{tpu_custom_call.1} parent=71 // pred_check
          %p545 = pneg %p114
        $region86: #{tpu_custom_call.1} parent=71 // pred_check_branch
          %547 = sbr.rel (%p545) target = $region88
        $region87: #{tpu_custom_call.1} parent=71 // pred_region
          %548 = dma.done [#allocation11], 2048
        $region88: #{tpu_custom_call.1} parent=71 // pred_fallthru
          _
        // Predicated region
        $region89: #{tpu_custom_call.1} parent=71 // pred_check
          %p549 = pneg %p135
        $region90: #{tpu_custom_call.1} parent=71 // pred_check_branch
          %551 = sbr.rel (%p549) target = $region92
        $region91: #{tpu_custom_call.1} parent=71 // pred_region
          %552 = dma.done [#allocation14], 6144
        $region92: #{tpu_custom_call.1} parent=71 // pred_fallthru
          _
        // Predicated region
        $region93: #{tpu_custom_call.1} parent=71 // pred_check
          %p553 = pneg %p156
        $region94: #{tpu_custom_call.1} parent=71 // pred_check_branch
          %555 = sbr.rel (%p553) target = $region96
        $region95: #{tpu_custom_call.1} parent=71 // pred_region
          %556 = dma.done [#allocation14], 6144
        $region96: #{tpu_custom_call.1} parent=71 // pred_fallthru
          _
        // Predicated region
        $region97: #{tpu_custom_call.1} parent=71 // pred_check
          %p557 = pneg %p219
        $region98: #{tpu_custom_call.1} parent=71 // pred_check_branch
          %559 = sbr.rel (%p557) target = $region100
        $region99: #{tpu_custom_call.1} parent=71 // pred_region
          %560 = dma.done [#allocation17], 2048
        $region100: #{tpu_custom_call.1} parent=71 // pred_fallthru
          _
        %s561 = sand.u32 %s35, 1
        %s562 = scalar_lea.sflag [#allocation6], %s561
        %s563 = sand.u32 %s274, 1
        %s564 = smul.addr %s563, 256
        %s565 = scalar_lea.vmem [#allocation18], %s564
        // Predicated region
        $region101: #{tpu_custom_call.1} parent=71 // pred_check
          %p566 = pneg %p287
        $region102: #{tpu_custom_call.1} parent=71 // pred_check_branch
          %568 = sbr.rel (%p566) target = $region104
        $region103: #{tpu_custom_call.1} parent=71 // pred_region
          %569 = dma.done %s562, 4096
        $region104: #{tpu_custom_call.1} parent=71 // pred_fallthru
          _
        %570 = sfence
        %p571 = pneg %p51
        %p572 = pneg %p48
        %p573 = pneg %p72
        %p574 = pneg %p69
        %p575 = pneg %p93
        %p576 = pneg %p90
        %p577 = pneg %p114
        %p578 = pneg %p111
        %p579 = pneg %p135
        %p580 = pneg %p132
        %p581 = pneg %p156
        %p582 = pneg %p153
        %p583 = pneg %p177
        %p584 = pneg %p174
        %p585 = pneg %p198
        %p586 = pneg %p195
        %p587 = pneg %p219
        %p588 = pneg %p216
        %p589 = pneg %p240
        %p590 = pneg %p237
        %p591 = pneg %p261
        %p592 = pneg %p258
        %s593 = sand.u32 %s35, 1
        %s594 = scalar_lea.sflag [#allocation6], %s593
        %s595 = sand.u32 %s274, 1
        %s596 = smul.addr %s595, 256
        %s597 = scalar_lea.vmem [#allocation18], %s596
        %p598 = pneg %p287
        %p599 = pneg %p284
        %s600 = smul.u32 2, %s35
        %p601 = scmp.lt.s32.totalorder %s600, 3
        %s602 = scalar_select %p601, %s600, 3
        %s603 = scalar_lea.vmem %s13, %s602
        %p604 = pneg %p313
        %p605 = pneg %p310
        %p606 = pneg %p334
        %p607 = pneg %p331
        %p608 = pneg %p355
        %p609 = pneg %p352
        %p610 = pneg %p381
        %p611 = pneg %p378
        %s612 = sand.u32 %s35, 1
        %s613 = scalar_lea.sflag [#allocation7], %s612
        %s614 = sand.u32 %s368, 1
        %s615 = smul.addr %s614, 16
        %s616 = scalar_lea.vmem [#allocation22], %s615
        %s617 = smul.u32 2, %s35
        %s618 = smul.u32 2, %s35
        %p619 = scmp.lt.s32.totalorder %s618, 3
        %s620 = scalar_select %p619, %s618, 3
        %s621 = scalar_lea.vmem %s13, %s620
        %s622 = smul.u32 2, %s35
        %s623 = smul.u32 2, %s35
        %p624 = scmp.eq.s32.totalorder %s35, 0
        // Predicated region
        $region105: #{tpu_custom_call.1} parent=71 // pred_check
          %p625 = pneg %p624
        $region106: #{tpu_custom_call.1} parent=71 // pred_check_branch
          %627 = sbr.rel (%p625) target = $region108
        $region107: #{tpu_custom_call.1} parent=71 // pred_region
          %s628 = sld [smem:[#allocation5]]
          %s629 = smul.addr %s628, 16
          %s630 = scalar_lea.hbm %s1, %s629
          // Predicated region
          $region109: #{tpu_custom_call.1} parent=107 // pred_check
            _
          $region110: #{tpu_custom_call.1} parent=107 // pred_check_branch
            %632 = sbr.rel target = $region112
          $region111: #{tpu_custom_call.1} parent=107 // pred_region
            %633 = sst [smem:[#allocation25]] [#allocation24]
            %634 = sst [smem:[#allocation26]] [#allocation23]
          $region112: #{tpu_custom_call.1} parent=107 // pred_fallthru
            _
          %636 = shalt.err (0)
          %s638 = sshll.u32 [#allocation3], 4
          %s639 = int_to_ptr.vmem [resolvable:$true] %s638
          %641 = dma.hbm_to_vmem [thread:$0]  %s630, 16, %s639, [#allocation4]
          %s642 = sld [smem:[#allocation5 + $0x1]]
          %s643 = smul.addr %s642, 16
          %s644 = scalar_lea.hbm %s1, %s643
          %s645 = scalar_lea.vmem [#allocation3], 1
          %s646 = scalar_lea.sflag [#allocation4], 1
          // Predicated region
          $region113: #{tpu_custom_call.1} parent=107 // pred_check
            _
          $region114: #{tpu_custom_call.1} parent=107 // pred_check_branch
            %648 = sbr.rel target = $region116
          $region115: #{tpu_custom_call.1} parent=107 // pred_region
            %649 = sst [smem:[#allocation25]] [#allocation28]
            %650 = sst [smem:[#allocation26]] [#allocation27]
          $region116: #{tpu_custom_call.1} parent=107 // pred_fallthru
            _
          %652 = shalt.err (0)
          %s654 = sshll.u32 %s645, 4
          %s655 = int_to_ptr.vmem [resolvable:$true] %s654
          %657 = dma.hbm_to_vmem [thread:$0]  %s644, 16, %s655, %s646
          %s658 = sld [smem:[#allocation5 + $0x2]]
          %s659 = smul.addr %s658, 16
          %s660 = scalar_lea.hbm %s1, %s659
          %s661 = scalar_lea.vmem [#allocation3], 2
          %s662 = scalar_lea.sflag [#allocation4], 2
          // Predicated region
          $region117: #{tpu_custom_call.1} parent=107 // pred_check
            _
          $region118: #{tpu_custom_call.1} parent=107 // pred_check_branch
            %664 = sbr.rel target = $region120
          $region119: #{tpu_custom_call.1} parent=107 // pred_region
            %665 = sst [smem:[#allocation25]] [#allocation30]
            %666 = sst [smem:[#allocation26]] [#allocation29]
          $region120: #{tpu_custom_call.1} parent=107 // pred_fallthru
            _
          %668 = shalt.err (0)
          %s670 = sshll.u32 %s661, 4
          %s671 = int_to_ptr.vmem [resolvable:$true] %s670
          %673 = dma.hbm_to_vmem [thread:$0]  %s660, 16, %s671, %s662
          %s674 = sld [smem:[#allocation5 + $0x3]]
          %s675 = smul.addr %s674, 16
          %s676 = scalar_lea.hbm %s1, %s675
          %s677 = scalar_lea.vmem [#allocation3], 3
          %s678 = scalar_lea.sflag [#allocation4], 3
          // Predicated region
          $region121: #{tpu_custom_call.1} parent=107 // pred_check
            _
          $region122: #{tpu_custom_call.1} parent=107 // pred_check_branch
            %680 = sbr.rel target = $region124
          $region123: #{tpu_custom_call.1} parent=107 // pred_region
            %681 = sst [smem:[#allocation25]] [#allocation32]
            %682 = sst [smem:[#allocation26]] [#allocation31]
          $region124: #{tpu_custom_call.1} parent=107 // pred_fallthru
            _
          %684 = shalt.err (0)
          %s686 = sshll.u32 %s677, 4
          %s687 = int_to_ptr.vmem [resolvable:$true] %s686
          %689 = dma.hbm_to_vmem [thread:$0]  %s676, 16, %s687, %s678
          %s690 = sld [smem:[#allocation5 + $0x4]]
          %s691 = smul.addr %s690, 16
          %s692 = scalar_lea.hbm %s1, %s691
          %s693 = scalar_lea.vmem [#allocation3], 4
          %s694 = scalar_lea.sflag [#allocation4], 4
          // Predicated region
          $region125: #{tpu_custom_call.1} parent=107 // pred_check
            _
          $region126: #{tpu_custom_call.1} parent=107 // pred_check_branch
            %696 = sbr.rel target = $region128
          $region127: #{tpu_custom_call.1} parent=107 // pred_region
            %697 = sst [smem:[#allocation25]] [#allocation34]
            %698 = sst [smem:[#allocation26]] [#allocation33]
          $region128: #{tpu_custom_call.1} parent=107 // pred_fallthru
            _
          %700 = shalt.err (0)
          %s702 = sshll.u32 %s693, 4
          %s703 = int_to_ptr.vmem [resolvable:$true] %s702
          %705 = dma.hbm_to_vmem [thread:$0]  %s692, 16, %s703, %s694
          %s706 = sld [smem:[#allocation5 + $0x5]]
          %s707 = smul.addr %s706, 16
          %s708 = scalar_lea.hbm %s1, %s707
          %s709 = scalar_lea.vmem [#allocation3], 5
          %s710 = scalar_lea.sflag [#allocation4], 5
          // Predicated region
          $region129: #{tpu_custom_call.1} parent=107 // pred_check
            _
          $region130: #{tpu_custom_call.1} parent=107 // pred_check_branch
            %712 = sbr.rel target = $region132
          $region131: #{tpu_custom_call.1} parent=107 // pred_region
            %713 = sst [smem:[#allocation25]] [#allocation36]
            %714 = sst [smem:[#allocation26]] [#allocation35]
          $region132: #{tpu_custom_call.1} parent=107 // pred_fallthru
            _
          %716 = shalt.err (0)
          %s718 = sshll.u32 %s709, 4
          %s719 = int_to_ptr.vmem [resolvable:$true] %s718
          %721 = dma.hbm_to_vmem [thread:$0]  %s708, 16, %s719, %s710
          %s722 = sld [smem:[#allocation5 + $0x6]]
          %s723 = smul.addr %s722, 16
          %s724 = scalar_lea.hbm %s1, %s723
          %s725 = scalar_lea.vmem [#allocation3], 6
          %s726 = scalar_lea.sflag [#allocation4], 6
          // Predicated region
          $region133: #{tpu_custom_call.1} parent=107 // pred_check
            _
          $region134: #{tpu_custom_call.1} parent=107 // pred_check_branch
            %728 = sbr.rel target = $region136
          $region135: #{tpu_custom_call.1} parent=107 // pred_region
            %729 = sst [smem:[#allocation25]] [#allocation38]
            %730 = sst [smem:[#allocation26]] [#allocation37]
          $region136: #{tpu_custom_call.1} parent=107 // pred_fallthru
            _
          %732 = shalt.err (0)
          %s734 = sshll.u32 %s725, 4
          %s735 = int_to_ptr.vmem [resolvable:$true] %s734
          %737 = dma.hbm_to_vmem [thread:$0]  %s724, 16, %s735, %s726
          %s738 = sld [smem:[#allocation5 + $0x7]]
          %s739 = smul.addr %s738, 16
          %s740 = scalar_lea.hbm %s1, %s739
          %s741 = scalar_lea.vmem [#allocation3], 7
          %s742 = scalar_lea.sflag [#allocation4], 7
          // Predicated region
          $region137: #{tpu_custom_call.1} parent=107 // pred_check
            _
          $region138: #{tpu_custom_call.1} parent=107 // pred_check_branch
            %744 = sbr.rel target = $region140
          $region139: #{tpu_custom_call.1} parent=107 // pred_region
            %745 = sst [smem:[#allocation25]] [#allocation40]
            %746 = sst [smem:[#allocation26]] [#allocation39]
          $region140: #{tpu_custom_call.1} parent=107 // pred_fallthru
            _
          %748 = shalt.err (0)
          %s750 = sshll.u32 %s741, 4
          %s751 = int_to_ptr.vmem [resolvable:$true] %s750
          %753 = dma.hbm_to_vmem [thread:$0]  %s740, 16, %s751, %s742
          %v754 = vld [vmem:[#allocation9] sm:$0xff]
          %v755 = vld [vmem:[#allocation15] sm:$0xff]
          %v756 = vld [vmem:[#allocation15 + $0x8] sm:$0xff]
          %v757 = vld [vmem:[#allocation15 + $0x10] sm:$0xff]
          %v758 = vld [vmem:[#allocation15 + $0x18] sm:$0xff]
          %v759 = vld [vmem:[#allocation15 + $0x20] sm:$0xff]
          %v760 = vld [vmem:[#allocation15 + $0x28] sm:$0xff]
          %v761 = vld [vmem:[#allocation15 + $0x30] sm:$0xff]
          %v762 = vld [vmem:[#allocation15 + $0x38] sm:$0xff]
          %v763 = vld [vmem:[#allocation15 + $0x40] sm:$0xff]
          %v764 = vld [vmem:[#allocation15 + $0x48] sm:$0xff]
          %v765 = vld [vmem:[#allocation15 + $0x50] sm:$0xff]
          %v766 = vld [vmem:[#allocation15 + $0x58] sm:$0xff]
          %v767 = vld [vmem:[#allocation15 + $0x60] sm:$0xff]
          %v768 = vld [vmem:[#allocation15 + $0x68] sm:$0xff]
          %v769 = vld [vmem:[#allocation15 + $0x70] sm:$0xff]
          %v770 = vld [vmem:[#allocation15 + $0x78] sm:$0xff]
          %v771 = vld [vmem:[#allocation15 + $0x80] sm:$0xff]
          %v772 = vld [vmem:[#allocation15 + $0x88] sm:$0xff]
          %v773 = vld [vmem:[#allocation15 + $0x90] sm:$0xff]
          %v774 = vld [vmem:[#allocation15 + $0x98] sm:$0xff]
          %v775 = vld [vmem:[#allocation15 + $0xa0] sm:$0xff]
          %v776 = vld [vmem:[#allocation15 + $0xa8] sm:$0xff]
          %v777 = vld [vmem:[#allocation15 + $0xb0] sm:$0xff]
          %v778 = vld [vmem:[#allocation15 + $0xb8] sm:$0xff]
          %v779 = vld [vmem:[#allocation15 + $0xc0] sm:$0xff]
          %v780 = vld [vmem:[#allocation15 + $0xc8] sm:$0xff]
          %v781 = vld [vmem:[#allocation15 + $0xd0] sm:$0xff]
          %v782 = vld [vmem:[#allocation15 + $0xd8] sm:$0xff]
          %v783 = vld [vmem:[#allocation15 + $0xe0] sm:$0xff]
          %v784 = vld [vmem:[#allocation15 + $0xe8] sm:$0xff]
          %v785 = vld [vmem:[#allocation15 + $0xf0] sm:$0xff]
          %v786 = vld [vmem:[#allocation15 + $0xf8] sm:$0xff]
          %v787 = vld [vmem:[#allocation15 + $0x100] sm:$0xff]
          %v788 = vld [vmem:[#allocation15 + $0x108] sm:$0xff]
          %v789 = vld [vmem:[#allocation15 + $0x110] sm:$0xff]
          %v790 = vld [vmem:[#allocation15 + $0x118] sm:$0xff]
          %v791 = vld [vmem:[#allocation15 + $0x120] sm:$0xff]
          %v792 = vld [vmem:[#allocation15 + $0x128] sm:$0xff]
          %v793 = vld [vmem:[#allocation15 + $0x130] sm:$0xff]
          %v794 = vld [vmem:[#allocation15 + $0x138] sm:$0xff]
          %v795 = vld [vmem:[#allocation15 + $0x140] sm:$0xff]
          %v796 = vld [vmem:[#allocation15 + $0x148] sm:$0xff]
          %v797 = vld [vmem:[#allocation15 + $0x150] sm:$0xff]
          %v798 = vld [vmem:[#allocation15 + $0x158] sm:$0xff]
          %v799 = vld [vmem:[#allocation15 + $0x160] sm:$0xff]
          %v800 = vld [vmem:[#allocation15 + $0x168] sm:$0xff]
          %v801 = vld [vmem:[#allocation15 + $0x170] sm:$0xff]
          %v802 = vld [vmem:[#allocation15 + $0x178] sm:$0xff]
          %v803 = vld [vmem:[%s8] sm:$0x7]
          %v805 = vlaneseq
          %v806 = vshrl.u32 %v805, 7
          %v807 = vsub.s32 0, %v806
          %v808 = vrot.slane %v803, %v807
          %v809 = vlaneseq
          %v810 = vshrl.u32 %v809, 7
          %v811 = vsub.s32 1, %v810
          %v812 = vrot.slane %v803, %v811
          %v813 = vlaneseq
          %v814 = vshrl.u32 %v813, 7
          %v815 = vsub.s32 2, %v814
          %v816 = vrot.slane %v803, %v815
          %820 = vmatprep.subr.mxu0 %v801
          %821 = vmatpush1.msra.mxu0 %v800
          %822 = vmatprep.subr.mxu0 %v798
          %823 = vmatpush1.msra.mxu0 %v797
          %824 = vmatprep.subr.mxu0 %v795
          %825 = vmatpush1.msra.mxu0 %v794
          %826 = vmatprep.subr.mxu0 %v792
          %827 = vmatpush1.msra.mxu0 %v791
          %828 = vmatprep.subr.mxu0 %v789
          %829 = vmatpush1.msra.mxu0 %v788
          %830 = vmatprep.subr.mxu0 %v786
          %831 = vmatpush1.msra.mxu0 %v785
          %832 = vmatprep.subr.mxu0 %v783
          %833 = vmatpush1.msra.mxu0 %v782
          %834 = vmatprep.subr.mxu0 %v780
          %835 = vmatpush1.msra.mxu0 %v779
          %836 = vmatprep.subr.mxu0 %v777
          %837 = vmatpush1.msra.mxu0 %v776
          %838 = vmatprep.subr.mxu0 %v774
          %839 = vmatpush1.msra.mxu0 %v773
          %840 = vmatprep.subr.mxu0 %v771
          %841 = vmatpush1.msra.mxu0 %v770
          %842 = vmatprep.subr.mxu0 %v768
          %843 = vmatpush1.msra.mxu0 %v767
          %844 = vmatprep.subr.mxu0 %v765
          %845 = vmatpush1.msra.mxu0 %v764
          %846 = vmatprep.subr.mxu0 %v762
          %847 = vmatpush1.msra.mxu0 %v761
          %848 = vmatprep.subr.mxu0 %v759
          %849 = vmatpush1.msra.mxu0 %v758
          %850 = vmatprep.subr.mxu0 %v756
          %851 = vmatpush1.msra.mxu0 %v755
          %852 = vmatprep.subr.mxu0 0.0
          %853 = vmatpush2.msra.mxu0 0.0
          %854 = vmatprep.subr.mxu0 0.0
          %855 = vmatpush2.msra.mxu0 0.0
          %856 = vmatprep.subr.mxu0 0.0
          %857 = vmatpush2.msra.mxu0 0.0
          %858 = vmatprep.subr.mxu0 0.0
          %859 = vmatpush2.msra.mxu0 0.0
          %860 = vmatprep.subr.mxu0 0.0
          %861 = vmatpush2.msra.mxu0 0.0
          %862 = vmatprep.subr.mxu0 0.0
          %863 = vmatpush2.msra.mxu0 0.0
          %864 = vmatprep.subr.mxu0 0.0
          %865 = vmatpush2.msra.mxu0 0.0
          %866 = vmatprep.subr.mxu0 0.0
          %867 = vmatpush2.msra.mxu0 0.0
          %868 = vmatprep.subr.mxu0 0.0
          %869 = vmatpush2.msra.mxu0 0.0
          %870 = vmatprep.subr.mxu0 0.0
          %871 = vmatpush2.msra.mxu0 0.0
          %872 = vmatprep.subr.mxu0 0.0
          %873 = vmatpush2.msra.mxu0 0.0
          %874 = vmatprep.subr.mxu0 0.0
          %875 = vmatpush2.msra.mxu0 0.0
          %876 = vmatprep.subr.mxu0 0.0
          %877 = vmatpush2.msra.mxu0 0.0
          %878 = vmatprep.subr.mxu0 0.0
          %879 = vmatpush2.msra.mxu0 0.0
          %880 = vmatprep.subr.mxu0 0.0
          %881 = vmatpush2.msra.mxu0 0.0
          %882 = vmatprep.subr.mxu0 0.0
          %883 = vmatpush2.msra.mxu0 0.0
          %884 = vmatprep.mubr.f32.mxu0 0.0
          %885 = vmatmul.mubr.f32.gmra.mxu0 %v754
          %v886 = vpop.f32.mrf.mxu0
          %v887 = vadd.f32 %v808, %v886
          %v888 = vpop.f32.mrf.mxu0
          %v889 = vadd.f32 %v812, %v888
          %890 = vdwg.mxu0
          %891 = vmatprep.subr.mxu0 0.0
          %892 = vmatpush1.msra.mxu0 %v802
          %893 = vmatprep.subr.mxu0 0.0
          %894 = vmatpush1.msra.mxu0 %v799
          %895 = vmatprep.subr.mxu0 0.0
          %896 = vmatpush1.msra.mxu0 %v796
          %897 = vmatprep.subr.mxu0 0.0
          %898 = vmatpush1.msra.mxu0 %v793
          %899 = vmatprep.subr.mxu0 0.0
          %900 = vmatpush1.msra.mxu0 %v790
          %901 = vmatprep.subr.mxu0 0.0
          %902 = vmatpush1.msra.mxu0 %v787
          %903 = vmatprep.subr.mxu0 0.0
          %904 = vmatpush1.msra.mxu0 %v784
          %905 = vmatprep.subr.mxu0 0.0
          %906 = vmatpush1.msra.mxu0 %v781
          %907 = vmatprep.subr.mxu0 0.0
          %908 = vmatpush1.msra.mxu0 %v778
          %909 = vmatprep.subr.mxu0 0.0
          %910 = vmatpush1.msra.mxu0 %v775
          %911 = vmatprep.subr.mxu0 0.0
          %912 = vmatpush1.msra.mxu0 %v772
          %913 = vmatprep.subr.mxu0 0.0
          %914 = vmatpush1.msra.mxu0 %v769
          %915 = vmatprep.subr.mxu0 0.0
          %916 = vmatpush1.msra.mxu0 %v766
          %917 = vmatprep.subr.mxu0 0.0
          %918 = vmatpush1.msra.mxu0 %v763
          %919 = vmatprep.subr.mxu0 0.0
          %920 = vmatpush1.msra.mxu0 %v760
          %921 = vmatprep.subr.mxu0 0.0
          %922 = vmatpush1.msra.mxu0 %v757
          %923 = vmatprep.subr.mxu0 0.0
          %924 = vmatpush2.msra.mxu0 0.0
          %925 = vmatprep.subr.mxu0 0.0
          %926 = vmatpush2.msra.mxu0 0.0
          %927 = vmatprep.subr.mxu0 0.0
          %928 = vmatpush2.msra.mxu0 0.0
          %929 = vmatprep.subr.mxu0 0.0
          %930 = vmatpush2.msra.mxu0 0.0
          %931 = vmatprep.subr.mxu0 0.0
          %932 = vmatpush2.msra.mxu0 0.0
          %933 = vmatprep.subr.mxu0 0.0
          %934 = vmatpush2.msra.mxu0 0.0
          %935 = vmatprep.subr.mxu0 0.0
          %936 = vmatpush2.msra.mxu0 0.0
          %937 = vmatprep.subr.mxu0 0.0
          %938 = vmatpush2.msra.mxu0 0.0
          %939 = vmatprep.subr.mxu0 0.0
          %940 = vmatpush2.msra.mxu0 0.0
          %941 = vmatprep.subr.mxu0 0.0
          %942 = vmatpush2.msra.mxu0 0.0
          %943 = vmatprep.subr.mxu0 0.0
          %944 = vmatpush2.msra.mxu0 0.0
          %945 = vmatprep.subr.mxu0 0.0
          %946 = vmatpush2.msra.mxu0 0.0
          %947 = vmatprep.subr.mxu0 0.0
          %948 = vmatpush2.msra.mxu0 0.0
          %949 = vmatprep.subr.mxu0 0.0
          %950 = vmatpush2.msra.mxu0 0.0
          %951 = vmatprep.subr.mxu0 0.0
          %952 = vmatpush2.msra.mxu0 0.0
          %953 = vmatprep.subr.mxu0 0.0
          %954 = vmatpush2.msra.mxu0 0.0
          %955 = vmatprep.mubr.f32.mxu0 0.0
          %956 = vmatmul.mubr.f32.gmra.mxu0 %v754
          %v957 = vpop.f32.mrf.mxu0
          %v958 = vadd.f32 %v816, %v957
          %v959 = vpop.f32.mrf.mxu0
          %960 = vdwg.mxu0
          %s961 = sld [smem:[#allocation5]]
          %s962 = smul.u32 1, 1
          %s963 = sshll.u32 %s962, 4
          %964 = dma.done [#allocation4], %s963
          %s965 = sld [smem:[#allocation5 + $0x1]]
          %s966 = sshll.u32 %s962, 4
          %967 = dma.done %s646, %s966
          %s968 = sld [smem:[#allocation5 + $0x2]]
          %s969 = sshll.u32 %s962, 4
          %970 = dma.done %s662, %s969
          %s971 = sld [smem:[#allocation5 + $0x3]]
          %s972 = sshll.u32 %s962, 4
          %973 = dma.done %s678, %s972
          %s974 = sld [smem:[#allocation5 + $0x4]]
          %s975 = sshll.u32 %s962, 4
          %976 = dma.done %s694, %s975
          %s977 = sld [smem:[#allocation5 + $0x5]]
          %s978 = sshll.u32 %s962, 4
          %979 = dma.done %s710, %s978
          %s980 = sld [smem:[#allocation5 + $0x6]]
          %s981 = sshll.u32 %s962, 4
          %982 = dma.done %s726, %s981
          %s983 = sld [smem:[#allocation5 + $0x7]]
          %s984 = sshll.u32 %s962, 4
          %985 = dma.done %s742, %s984
          %v986 = vld [vmem:[#allocation3] sm:$0xff]
          %v987 = vld [vmem:[#allocation13] sm:$0xff]
          %v988 = vld [vmem:[#allocation13 + $0x8] sm:$0xff]
          %v989 = vld [vmem:[#allocation13 + $0x10] sm:$0xff]
          %v990 = vld [vmem:[#allocation13 + $0x18] sm:$0xff]
          %v991 = vld [vmem:[#allocation13 + $0x20] sm:$0xff]
          %v992 = vld [vmem:[#allocation13 + $0x28] sm:$0xff]
          %v993 = vld [vmem:[#allocation13 + $0x30] sm:$0xff]
          %v994 = vld [vmem:[#allocation13 + $0x38] sm:$0xff]
          %v995 = vld [vmem:[#allocation13 + $0x40] sm:$0xff]
          %v996 = vld [vmem:[#allocation13 + $0x48] sm:$0xff]
          %v997 = vld [vmem:[#allocation13 + $0x50] sm:$0xff]
          %v998 = vld [vmem:[#allocation13 + $0x58] sm:$0xff]
          %v999 = vld [vmem:[#allocation13 + $0x60] sm:$0xff]
          %v1000 = vld [vmem:[#allocation13 + $0x68] sm:$0xff]
          %v1001 = vld [vmem:[#allocation13 + $0x70] sm:$0xff]
          %v1002 = vld [vmem:[#allocation13 + $0x78] sm:$0xff]
          %v1003 = vld [vmem:[#allocation13 + $0x80] sm:$0xff]
          %v1004 = vld [vmem:[#allocation13 + $0x88] sm:$0xff]
          %v1005 = vld [vmem:[#allocation13 + $0x90] sm:$0xff]
          %v1006 = vld [vmem:[#allocation13 + $0x98] sm:$0xff]
          %v1007 = vld [vmem:[#allocation13 + $0xa0] sm:$0xff]
          %v1008 = vld [vmem:[#allocation13 + $0xa8] sm:$0xff]
          %v1009 = vld [vmem:[#allocation13 + $0xb0] sm:$0xff]
          %v1010 = vld [vmem:[#allocation13 + $0xb8] sm:$0xff]
          %v1011 = vld [vmem:[#allocation13 + $0xc0] sm:$0xff]
          %v1012 = vld [vmem:[#allocation13 + $0xc8] sm:$0xff]
          %v1013 = vld [vmem:[#allocation13 + $0xd0] sm:$0xff]
          %v1014 = vld [vmem:[#allocation13 + $0xd8] sm:$0xff]
          %v1015 = vld [vmem:[#allocation13 + $0xe0] sm:$0xff]
          %v1016 = vld [vmem:[#allocation13 + $0xe8] sm:$0xff]
          %v1017 = vld [vmem:[#allocation13 + $0xf0] sm:$0xff]
          %v1018 = vld [vmem:[#allocation13 + $0xf8] sm:$0xff]
          %v1019 = vld [vmem:[#allocation13 + $0x100] sm:$0xff]
          %v1020 = vld [vmem:[#allocation13 + $0x108] sm:$0xff]
          %v1021 = vld [vmem:[#allocation13 + $0x110] sm:$0xff]
          %v1022 = vld [vmem:[#allocation13 + $0x118] sm:$0xff]
          %v1023 = vld [vmem:[#allocation13 + $0x120] sm:$0xff]
          %v1024 = vld [vmem:[#allocation13 + $0x128] sm:$0xff]
          %v1025 = vld [vmem:[#allocation13 + $0x130] sm:$0xff]
          %v1026 = vld [vmem:[#allocation13 + $0x138] sm:$0xff]
          %v1027 = vld [vmem:[#allocation13 + $0x140] sm:$0xff]
          %v1028 = vld [vmem:[#allocation13 + $0x148] sm:$0xff]
          %v1029 = vld [vmem:[#allocation13 + $0x150] sm:$0xff]
          %v1030 = vld [vmem:[#allocation13 + $0x158] sm:$0xff]
          %v1031 = vld [vmem:[#allocation13 + $0x160] sm:$0xff]
          %v1032 = vld [vmem:[#allocation13 + $0x168] sm:$0xff]
          %v1033 = vld [vmem:[#allocation13 + $0x170] sm:$0xff]
          %v1034 = vld [vmem:[#allocation13 + $0x178] sm:$0xff]
          %v1035 = vld [vmem:[%s7] sm:$0x7]
          %v1037 = vlaneseq
          %v1038 = vshrl.u32 %v1037, 7
          %v1039 = vsub.s32 0, %v1038
          %v1040 = vrot.slane %v1035, %v1039
          %v1041 = vlaneseq
          %v1042 = vshrl.u32 %v1041, 7
          %v1043 = vsub.s32 1, %v1042
          %v1044 = vrot.slane %v1035, %v1043
          %v1045 = vlaneseq
          %v1046 = vshrl.u32 %v1045, 7
          %v1047 = vsub.s32 2, %v1046
          %v1048 = vrot.slane %v1035, %v1047
          %1052 = vmatprep.subr.mxu0 %v1033
          %1053 = vmatpush1.msra.mxu0 %v1032
          %1054 = vmatprep.subr.mxu0 %v1030
          %1055 = vmatpush1.msra.mxu0 %v1029
          %1056 = vmatprep.subr.mxu0 %v1027
          %1057 = vmatpush1.msra.mxu0 %v1026
          %1058 = vmatprep.subr.mxu0 %v1024
          %1059 = vmatpush1.msra.mxu0 %v1023
          %1060 = vmatprep.subr.mxu0 %v1021
          %1061 = vmatpush1.msra.mxu0 %v1020
          %1062 = vmatprep.subr.mxu0 %v1018
          %1063 = vmatpush1.msra.mxu0 %v1017
          %1064 = vmatprep.subr.mxu0 %v1015
          %1065 = vmatpush1.msra.mxu0 %v1014
          %1066 = vmatprep.subr.mxu0 %v1012
          %1067 = vmatpush1.msra.mxu0 %v1011
          %1068 = vmatprep.subr.mxu0 %v1009
          %1069 = vmatpush1.msra.mxu0 %v1008
          %1070 = vmatprep.subr.mxu0 %v1006
          %1071 = vmatpush1.msra.mxu0 %v1005
          %1072 = vmatprep.subr.mxu0 %v1003
          %1073 = vmatpush1.msra.mxu0 %v1002
          %1074 = vmatprep.subr.mxu0 %v1000
          %1075 = vmatpush1.msra.mxu0 %v999
          %1076 = vmatprep.subr.mxu0 %v997
          %1077 = vmatpush1.msra.mxu0 %v996
          %1078 = vmatprep.subr.mxu0 %v994
          %1079 = vmatpush1.msra.mxu0 %v993
          %1080 = vmatprep.subr.mxu0 %v991
          %1081 = vmatpush1.msra.mxu0 %v990
          %1082 = vmatprep.subr.mxu0 %v988
          %1083 = vmatpush1.msra.mxu0 %v987
          %1084 = vmatprep.subr.mxu0 0.0
          %1085 = vmatpush2.msra.mxu0 0.0
          %1086 = vmatprep.subr.mxu0 0.0
          %1087 = vmatpush2.msra.mxu0 0.0
          %1088 = vmatprep.subr.mxu0 0.0
          %1089 = vmatpush2.msra.mxu0 0.0
          %1090 = vmatprep.subr.mxu0 0.0
          %1091 = vmatpush2.msra.mxu0 0.0
          %1092 = vmatprep.subr.mxu0 0.0
          %1093 = vmatpush2.msra.mxu0 0.0
          %1094 = vmatprep.subr.mxu0 0.0
          %1095 = vmatpush2.msra.mxu0 0.0
          %1096 = vmatprep.subr.mxu0 0.0
          %1097 = vmatpush2.msra.mxu0 0.0
          %1098 = vmatprep.subr.mxu0 0.0
          %1099 = vmatpush2.msra.mxu0 0.0
          %1100 = vmatprep.subr.mxu0 0.0
          %1101 = vmatpush2.msra.mxu0 0.0
          %1102 = vmatprep.subr.mxu0 0.0
          %1103 = vmatpush2.msra.mxu0 0.0
          %1104 = vmatprep.subr.mxu0 0.0
          %1105 = vmatpush2.msra.mxu0 0.0
          %1106 = vmatprep.subr.mxu0 0.0
          %1107 = vmatpush2.msra.mxu0 0.0
          %1108 = vmatprep.subr.mxu0 0.0
          %1109 = vmatpush2.msra.mxu0 0.0
          %1110 = vmatprep.subr.mxu0 0.0
          %1111 = vmatpush2.msra.mxu0 0.0
          %1112 = vmatprep.subr.mxu0 0.0
          %1113 = vmatpush2.msra.mxu0 0.0
          %1114 = vmatprep.subr.mxu0 0.0
          %1115 = vmatpush2.msra.mxu0 0.0
          %1116 = vmatprep.mubr.f32.mxu0 0.0
          %1117 = vmatmul.mubr.f32.gmra.mxu0 %v986
          %v1118 = vpop.f32.mrf.mxu0
          %v1119 = vadd.f32 %v1040, %v1118
          %v1120 = vpop.f32.mrf.mxu0
          %v1121 = vadd.f32 %v1044, %v1120
          %1122 = vdwg.mxu0
          %1123 = vmatprep.subr.mxu0 0.0
          %1124 = vmatpush1.msra.mxu0 %v1034
          %1125 = vmatprep.subr.mxu0 0.0
          %1126 = vmatpush1.msra.mxu0 %v1031
          %1127 = vmatprep.subr.mxu0 0.0
          %1128 = vmatpush1.msra.mxu0 %v1028
          %1129 = vmatprep.subr.mxu0 0.0
          %1130 = vmatpush1.msra.mxu0 %v1025
          %1131 = vmatprep.subr.mxu0 0.0
          %1132 = vmatpush1.msra.mxu0 %v1022
          %1133 = vmatprep.subr.mxu0 0.0
          %1134 = vmatpush1.msra.mxu0 %v1019
          %1135 = vmatprep.subr.mxu0 0.0
          %1136 = vmatpush1.msra.mxu0 %v1016
          %1137 = vmatprep.subr.mxu0 0.0
          %1138 = vmatpush1.msra.mxu0 %v1013
          %1139 = vmatprep.subr.mxu0 0.0
          %1140 = vmatpush1.msra.mxu0 %v1010
          %1141 = vmatprep.subr.mxu0 0.0
          %1142 = vmatpush1.msra.mxu0 %v1007
          %1143 = vmatprep.subr.mxu0 0.0
          %1144 = vmatpush1.msra.mxu0 %v1004
          %1145 = vmatprep.subr.mxu0 0.0
          %1146 = vmatpush1.msra.mxu0 %v1001
          %1147 = vmatprep.subr.mxu0 0.0
          %1148 = vmatpush1.msra.mxu0 %v998
          %1149 = vmatprep.subr.mxu0 0.0
          %1150 = vmatpush1.msra.mxu0 %v995
          %1151 = vmatprep.subr.mxu0 0.0
          %1152 = vmatpush1.msra.mxu0 %v992
          %1153 = vmatprep.subr.mxu0 0.0
          %1154 = vmatpush1.msra.mxu0 %v989
          %1155 = vmatprep.subr.mxu0 0.0
          %1156 = vmatpush2.msra.mxu0 0.0
          %1157 = vmatprep.subr.mxu0 0.0
          %1158 = vmatpush2.msra.mxu0 0.0
          %1159 = vmatprep.subr.mxu0 0.0
          %1160 = vmatpush2.msra.mxu0 0.0
          %1161 = vmatprep.subr.mxu0 0.0
          %1162 = vmatpush2.msra.mxu0 0.0
          %1163 = vmatprep.subr.mxu0 0.0
          %1164 = vmatpush2.msra.mxu0 0.0
          %1165 = vmatprep.subr.mxu0 0.0
          %1166 = vmatpush2.msra.mxu0 0.0
          %1167 = vmatprep.subr.mxu0 0.0
          %1168 = vmatpush2.msra.mxu0 0.0
          %1169 = vmatprep.subr.mxu0 0.0
          %1170 = vmatpush2.msra.mxu0 0.0
          %1171 = vmatprep.subr.mxu0 0.0
          %1172 = vmatpush2.msra.mxu0 0.0
          %1173 = vmatprep.subr.mxu0 0.0
          %1174 = vmatpush2.msra.mxu0 0.0
          %1175 = vmatprep.subr.mxu0 0.0
          %1176 = vmatpush2.msra.mxu0 0.0
          %1177 = vmatprep.subr.mxu0 0.0
          %1178 = vmatpush2.msra.mxu0 0.0
          %1179 = vmatprep.subr.mxu0 0.0
          %1180 = vmatpush2.msra.mxu0 0.0
          %1181 = vmatprep.subr.mxu0 0.0
          %1182 = vmatpush2.msra.mxu0 0.0
          %1183 = vmatprep.subr.mxu0 0.0
          %1184 = vmatpush2.msra.mxu0 0.0
          %1185 = vmatprep.subr.mxu0 0.0
          %1186 = vmatpush2.msra.mxu0 0.0
          %1187 = vmatprep.mubr.f32.mxu0 0.0
          %1188 = vmatmul.mubr.f32.gmra.mxu0 %v986
          %v1189 = vpop.f32.mrf.mxu0
          %v1190 = vadd.f32 %v1048, %v1189
          %v1191 = vpop.f32.mrf.mxu0
          %1192 = vdwg.mxu0
          %v1193 = vadd.f32 %v1119, %v887
          %v1194 = vxor.u32 %v1193, 2147483648
          %v1195 = vmul.f32 %v1194, 1.442695
          %v1196 = vpow.pop %v1195
          %v1197 = vadd.f32 %v1196, 1.0
          %v1198 = vrcp.pop %v1197
          %v1199 = vmul.f32 1.0, %v1198
          %v1200 = vadd.f32 %v1121, %v889
          %v1201 = vxor.u32 %v1200, 2147483648
          %v1202 = vmul.f32 %v1201, 1.442695
          %v1203 = vpow.pop %v1202
          %v1204 = vadd.f32 %v1203, 1.0
          %v1205 = vrcp.pop %v1204
          %v1206 = vmul.f32 1.0, %v1205
          %v1207 = vmul.f32 %v1199, %v958
          %v1208 = vadd.f32 %v1190, %v1207
          %v1209 = vtanh.pop %v1208
          %v1210 = vsub.f32 1.0, %v1206
          %v1211 = vmul.f32 %v1210, %v1209
          %v1212 = vmul.f32 %v1206, %v754
          %v1213 = vadd.f32 %v1211, %v1212
          %v1214 = vld [vmem:[#allocation16] sm:$0xff]
          %v1215 = vld [vmem:[#allocation16 + $0x8] sm:$0xff]
          %v1216 = vld [vmem:[#allocation16 + $0x10] sm:$0xff]
          %v1217 = vld [vmem:[#allocation16 + $0x18] sm:$0xff]
          %v1218 = vld [vmem:[#allocation16 + $0x20] sm:$0xff]
          %v1219 = vld [vmem:[#allocation16 + $0x28] sm:$0xff]
          %v1220 = vld [vmem:[#allocation16 + $0x30] sm:$0xff]
          %v1221 = vld [vmem:[#allocation16 + $0x38] sm:$0xff]
          %v1222 = vld [vmem:[#allocation16 + $0x40] sm:$0xff]
          %v1223 = vld [vmem:[#allocation16 + $0x48] sm:$0xff]
          %v1224 = vld [vmem:[#allocation16 + $0x50] sm:$0xff]
          %v1225 = vld [vmem:[#allocation16 + $0x58] sm:$0xff]
          %v1226 = vld [vmem:[#allocation16 + $0x60] sm:$0xff]
          %v1227 = vld [vmem:[#allocation16 + $0x68] sm:$0xff]
          %v1228 = vld [vmem:[#allocation16 + $0x70] sm:$0xff]
          %v1229 = vld [vmem:[#allocation16 + $0x78] sm:$0xff]
          %v1230 = vld [vmem:[%s10] sm:$0x1]
          %v1232 = vlaneseq
          %v1233 = vshrl.u32 %v1232, 7
          %v1234 = vsub.s32 0, %v1233
          %v1235 = vrot.slane %v1230, %v1234
          %1237 = vmatprep.subr.mxu0 0.0
          %1238 = vmatpush1.msra.mxu0 %v1229
          %1239 = vmatprep.subr.mxu0 0.0
          %1240 = vmatpush1.msra.mxu0 %v1228
          %1241 = vmatprep.subr.mxu0 0.0
          %1242 = vmatpush1.msra.mxu0 %v1227
          %1243 = vmatprep.subr.mxu0 0.0
          %1244 = vmatpush1.msra.mxu0 %v1226
          %1245 = vmatprep.subr.mxu0 0.0
          %1246 = vmatpush1.msra.mxu0 %v1225
          %1247 = vmatprep.subr.mxu0 0.0
          %1248 = vmatpush1.msra.mxu0 %v1224
          %1249 = vmatprep.subr.mxu0 0.0
          %1250 = vmatpush1.msra.mxu0 %v1223
          %1251 = vmatprep.subr.mxu0 0.0
          %1252 = vmatpush1.msra.mxu0 %v1222
          %1253 = vmatprep.subr.mxu0 0.0
          %1254 = vmatpush1.msra.mxu0 %v1221
          %1255 = vmatprep.subr.mxu0 0.0
          %1256 = vmatpush1.msra.mxu0 %v1220
          %1257 = vmatprep.subr.mxu0 0.0
          %1258 = vmatpush1.msra.mxu0 %v1219
          %1259 = vmatprep.subr.mxu0 0.0
          %1260 = vmatpush1.msra.mxu0 %v1218
          %1261 = vmatprep.subr.mxu0 0.0
          %1262 = vmatpush1.msra.mxu0 %v1217
          %1263 = vmatprep.subr.mxu0 0.0
          %1264 = vmatpush1.msra.mxu0 %v1216
          %1265 = vmatprep.subr.mxu0 0.0
          %1266 = vmatpush1.msra.mxu0 %v1215
          %1267 = vmatprep.subr.mxu0 0.0
          %1268 = vmatpush1.msra.mxu0 %v1214
          %1269 = vmatprep.subr.mxu0 0.0
          %1270 = vmatpush2.msra.mxu0 0.0
          %1271 = vmatprep.subr.mxu0 0.0
          %1272 = vmatpush2.msra.mxu0 0.0
          %1273 = vmatprep.subr.mxu0 0.0
          %1274 = vmatpush2.msra.mxu0 0.0
          %1275 = vmatprep.subr.mxu0 0.0
          %1276 = vmatpush2.msra.mxu0 0.0
          %1277 = vmatprep.subr.mxu0 0.0
          %1278 = vmatpush2.msra.mxu0 0.0
          %1279 = vmatprep.subr.mxu0 0.0
          %1280 = vmatpush2.msra.mxu0 0.0
          %1281 = vmatprep.subr.mxu0 0.0
          %1282 = vmatpush2.msra.mxu0 0.0
          %1283 = vmatprep.subr.mxu0 0.0
          %1284 = vmatpush2.msra.mxu0 0.0
          %1285 = vmatprep.subr.mxu0 0.0
          %1286 = vmatpush2.msra.mxu0 0.0
          %1287 = vmatprep.subr.mxu0 0.0
          %1288 = vmatpush2.msra.mxu0 0.0
          %1289 = vmatprep.subr.mxu0 0.0
          %1290 = vmatpush2.msra.mxu0 0.0
          %1291 = vmatprep.subr.mxu0 0.0
          %1292 = vmatpush2.msra.mxu0 0.0
          %1293 = vmatprep.subr.mxu0 0.0
          %1294 = vmatpush2.msra.mxu0 0.0
          %1295 = vmatprep.subr.mxu0 0.0
          %1296 = vmatpush2.msra.mxu0 0.0
          %1297 = vmatprep.subr.mxu0 0.0
          %1298 = vmatpush2.msra.mxu0 0.0
          %1299 = vmatprep.subr.mxu0 0.0
          %1300 = vmatpush2.msra.mxu0 0.0
          %1301 = vmatprep.mubr.f32.mxu0 0.0
          %1302 = vmatmul.mubr.f32.gmra.mxu0 %v1213
          %v1303 = vpop.f32.mrf.mxu0
          %v1304 = vadd.f32 %v1235, %v1303
          %v1305 = vpop.f32.mrf.mxu0
          %1306 = vdwg.mxu0
          %v1308 = vcombine.high %v1304, %v1304
          %v1310 = vunpack.c.l.s4 1966171168
          %v1311 = vunpack.c.0.s8 %v1310
          %v1312 = vlaneseq
          %v1313 = vshrl.u32 %v1312, 7
          %v1314 = vsub.s32 %v1311, %v1313
          %v1315 = vrot.slane %v1304, %v1314
          %v1317 = vunpack.c.l.s4 1966171168
          %v1318 = vunpack.c.0.s8 %v1317
          %v1319 = vlaneseq
          %v1320 = vshrl.u32 %v1319, 7
          %v1321 = vsub.s32 %v1318, %v1320
          %v1322 = vrot.slane %v1308, %v1321
          %v1323 = vcombine.high %v1315, %v1315
          %v1324 = vcombine.high %v1322, %v1322
          %v1326 = vunpack.c.l.s4 1966171168
          %v1327 = vunpack.c.0.s8 %v1326
          %v1328 = vlaneseq
          %v1329 = vshrl.u32 %v1328, 7
          %v1330 = vsub.s32 %v1327, %v1329
          %v1331 = vrot.slane %v1315, %v1330
          %v1333 = vunpack.c.l.s4 1966171168
          %v1334 = vunpack.c.0.s8 %v1333
          %v1335 = vlaneseq
          %v1336 = vshrl.u32 %v1335, 7
          %v1337 = vsub.s32 %v1334, %v1336
          %v1338 = vrot.slane %v1322, %v1337
          %v1340 = vunpack.c.l.s4 1966171168
          %v1341 = vunpack.c.0.s8 %v1340
          %v1342 = vlaneseq
          %v1343 = vshrl.u32 %v1342, 7
          %v1344 = vsub.s32 %v1341, %v1343
          %v1345 = vrot.slane %v1323, %v1344
          %v1347 = vunpack.c.l.s4 1966171168
          %v1348 = vunpack.c.0.s8 %v1347
          %v1349 = vlaneseq
          %v1350 = vshrl.u32 %v1349, 7
          %v1351 = vsub.s32 %v1348, %v1350
          %v1352 = vrot.slane %v1324, %v1351
          %v1353 = vcombine.high %v1331, %v1331
          %v1354 = vcombine.high %v1338, %v1338
          %v1355 = vcombine.high %v1345, %v1345
          %v1356 = vcombine.high %v1352, %v1352
          %v1357 = vld [vmem:[#allocation12] sm:$0xff]
          %v1358 = vld [vmem:[#allocation12 + $0x8] sm:$0xff]
          %v1359 = vld [vmem:[#allocation12 + $0x10] sm:$0xff]
          %v1360 = vld [vmem:[#allocation12 + $0x18] sm:$0xff]
          %v1361 = vld [vmem:[#allocation12 + $0x20] sm:$0xff]
          %v1362 = vld [vmem:[#allocation12 + $0x28] sm:$0xff]
          %v1363 = vld [vmem:[#allocation12 + $0x30] sm:$0xff]
          %v1364 = vld [vmem:[#allocation12 + $0x38] sm:$0xff]
          %v1365 = vld [vmem:[#allocation12 + $0x40] sm:$0xff]
          %v1366 = vld [vmem:[#allocation12 + $0x48] sm:$0xff]
          %v1367 = vld [vmem:[#allocation12 + $0x50] sm:$0xff]
          %v1368 = vld [vmem:[#allocation12 + $0x58] sm:$0xff]
          %v1369 = vld [vmem:[#allocation12 + $0x60] sm:$0xff]
          %v1370 = vld [vmem:[#allocation12 + $0x68] sm:$0xff]
          %v1371 = vld [vmem:[#allocation12 + $0x70] sm:$0xff]
          %v1372 = vld [vmem:[#allocation12 + $0x78] sm:$0xff]
          %v1373 = vlaneseq
          %v1374 = vshrl.u32 %v1373, 7
          %v1375 = vsub.s32 0, %v1374
          %v1376 = vrot.slane %v1331, %v1375
          %v1377 = vlaneseq
          %v1378 = vshrl.u32 %v1377, 7
          %v1379 = vsub.s32 0, %v1378
          %v1380 = vrot.slane %v1345, %v1379
          %v1381 = vlaneseq
          %v1382 = vshrl.u32 %v1381, 7
          %v1383 = vsub.s32 0, %v1382
          %v1384 = vrot.slane %v1353, %v1383
          %v1385 = vlaneseq
          %v1386 = vshrl.u32 %v1385, 7
          %v1387 = vsub.s32 0, %v1386
          %v1388 = vrot.slane %v1355, %v1387
          %v1389 = vlaneseq
          %v1390 = vshrl.u32 %v1389, 7
          %v1391 = vsub.s32 0, %v1390
          %v1392 = vrot.slane %v1338, %v1391
          %v1393 = vlaneseq
          %v1394 = vshrl.u32 %v1393, 7
          %v1395 = vsub.s32 0, %v1394
          %v1396 = vrot.slane %v1352, %v1395
          %v1397 = vlaneseq
          %v1398 = vshrl.u32 %v1397, 7
          %v1399 = vsub.s32 0, %v1398
          %v1400 = vrot.slane %v1354, %v1399
          %v1401 = vlaneseq
          %v1402 = vshrl.u32 %v1401, 7
          %v1403 = vsub.s32 0, %v1402
          %v1404 = vrot.slane %v1356, %v1403
          %v1413 = vadd.f32 %v1376, %v1357
          %v1414 = vadd.f32 %v1376, %v1358
          %v1415 = vadd.f32 %v1380, %v1359
          %v1416 = vadd.f32 %v1380, %v1360
          %v1417 = vadd.f32 %v1384, %v1361
          %v1418 = vadd.f32 %v1384, %v1362
          %v1419 = vadd.f32 %v1388, %v1363
          %v1420 = vadd.f32 %v1388, %v1364
          %v1421 = vadd.f32 %v1392, %v1365
          %v1422 = vadd.f32 %v1392, %v1366
          %v1423 = vadd.f32 %v1396, %v1367
          %v1424 = vadd.f32 %v1396, %v1368
          %v1425 = vadd.f32 %v1400, %v1369
          %v1426 = vadd.f32 %v1400, %v1370
          %v1427 = vadd.f32 %v1404, %v1371
          %v1428 = vadd.f32 %v1404, %v1372
          %v1429 = vtanh.pop %v1413
          %v1430 = vtanh.pop %v1414
          %v1431 = vtanh.pop %v1415
          %v1432 = vtanh.pop %v1416
          %v1433 = vtanh.pop %v1417
          %v1434 = vtanh.pop %v1418
          %v1435 = vtanh.pop %v1419
          %v1436 = vtanh.pop %v1420
          %v1437 = vtanh.pop %v1421
          %v1438 = vtanh.pop %v1422
          %v1439 = vtanh.pop %v1423
          %v1440 = vtanh.pop %v1424
          %v1441 = vtanh.pop %v1425
          %v1442 = vtanh.pop %v1426
          %v1443 = vtanh.pop %v1427
          %v1444 = vtanh.pop %v1428
          %v1445 = vld [vmem:[%s11] sm:$0x1]
          %v1447 = vlaneseq
          %v1448 = vshrl.u32 %v1447, 7
          %v1449 = vsub.s32 0, %v1448
          %v1450 = vrot.slane %v1445, %v1449
          %v1452 = vmul.f32 %v1429, %v1450
          %v1453 = vmul.f32 %v1430, %v1450
          %v1454 = vmul.f32 %v1431, %v1450
          %v1455 = vmul.f32 %v1432, %v1450
          %v1456 = vmul.f32 %v1433, %v1450
          %v1457 = vmul.f32 %v1434, %v1450
          %v1458 = vmul.f32 %v1435, %v1450
          %v1459 = vmul.f32 %v1436, %v1450
          %v1460 = vmul.f32 %v1437, %v1450
          %v1461 = vmul.f32 %v1438, %v1450
          %v1462 = vmul.f32 %v1439, %v1450
          %v1463 = vmul.f32 %v1440, %v1450
          %v1464 = vmul.f32 %v1441, %v1450
          %v1465 = vmul.f32 %v1442, %v1450
          %v1466 = vmul.f32 %v1443, %v1450
          %v1467 = vmul.f32 %v1444, %v1450
          %1468 = vadd.xlane.f32.xlu0 %v1452
          %v1469 = vpop.xlane.xlu0 %1468
          %1470 = vadd.xlane.f32.xlu0 %v1453
          %v1471 = vpop.xlane.xlu0 %1470
          %1472 = vadd.xlane.f32.xlu0 %v1454
          %v1473 = vpop.xlane.xlu0 %1472
          %1474 = vadd.xlane.f32.xlu0 %v1455
          %v1475 = vpop.xlane.xlu0 %1474
          %1476 = vadd.xlane.f32.xlu0 %v1456
          %v1477 = vpop.xlane.xlu0 %1476
          %1478 = vadd.xlane.f32.xlu0 %v1457
          %v1479 = vpop.xlane.xlu0 %1478
          %1480 = vadd.xlane.f32.xlu0 %v1458
          %v1481 = vpop.xlane.xlu0 %1480
          %1482 = vadd.xlane.f32.xlu0 %v1459
          %v1483 = vpop.xlane.xlu0 %1482
          %1484 = vadd.xlane.f32.xlu0 %v1460
          %v1485 = vpop.xlane.xlu0 %1484
          %1486 = vadd.xlane.f32.xlu0 %v1461
          %v1487 = vpop.xlane.xlu0 %1486
          %1488 = vadd.xlane.f32.xlu0 %v1462
          %v1489 = vpop.xlane.xlu0 %1488
          %1490 = vadd.xlane.f32.xlu0 %v1463
          %v1491 = vpop.xlane.xlu0 %1490
          %1492 = vadd.xlane.f32.xlu0 %v1464
          %v1493 = vpop.xlane.xlu0 %1492
          %1494 = vadd.xlane.f32.xlu0 %v1465
          %v1495 = vpop.xlane.xlu0 %1494
          %1496 = vadd.xlane.f32.xlu0 %v1466
          %v1497 = vpop.xlane.xlu0 %1496
          %1498 = vadd.xlane.f32.xlu0 %v1467
          %v1499 = vpop.xlane.xlu0 %1498
          %v1500 = vlaneseq
          %v1501 = vand.u32 %v1500, 127
          %vm1502 = vcmp.lt.s32.totalorder %v1501, 10
          %v1519 = vlaneseq
          %v1520 = vshrl.u32 %v1519, 7
          %v1521 = vsub.s32 %v1501, %v1520
          %v1522 = vrot.slane %v1469, %v1521
          %v1523 = vadd.s32 %v1501, 4294967288
          %v1524 = vlaneseq
          %v1525 = vshrl.u32 %v1524, 7
          %v1526 = vsub.s32 %v1523, %v1525
          %v1527 = vrot.slane %v1471, %v1526
          %vm1528 = vcmask 130112
          %v1529 = vsel %vm1528, %v1527, %v1522
          %v1530 = vlaneseq
          %v1531 = vshrl.u32 %v1530, 7
          %v1532 = vsub.s32 %v1501, %v1531
          %v1533 = vrot.slane %v1473, %v1532
          %v1534 = vlaneseq
          %v1535 = vshrl.u32 %v1534, 7
          %v1536 = vsub.s32 %v1523, %v1535
          %v1537 = vrot.slane %v1475, %v1536
          %v1538 = vsel %vm1528, %v1537, %v1533
          %v1539 = vlaneseq
          %v1540 = vshrl.u32 %v1539, 7
          %v1541 = vsub.s32 %v1501, %v1540
          %v1542 = vrot.slane %v1477, %v1541
          %v1543 = vlaneseq
          %v1544 = vshrl.u32 %v1543, 7
          %v1545 = vsub.s32 %v1523, %v1544
          %v1546 = vrot.slane %v1479, %v1545
          %v1547 = vsel %vm1528, %v1546, %v1542
          %v1548 = vlaneseq
          %v1549 = vshrl.u32 %v1548, 7
          %v1550 = vsub.s32 %v1501, %v1549
          %v1551 = vrot.slane %v1481, %v1550
          %v1552 = vlaneseq
          %v1553 = vshrl.u32 %v1552, 7
          %v1554 = vsub.s32 %v1523, %v1553
          %v1555 = vrot.slane %v1483, %v1554
          %v1556 = vsel %vm1528, %v1555, %v1551
          %v1557 = vlaneseq
          %v1558 = vshrl.u32 %v1557, 7
          %v1559 = vsub.s32 %v1501, %v1558
          %v1560 = vrot.slane %v1485, %v1559
          %v1561 = vlaneseq
          %v1562 = vshrl.u32 %v1561, 7
          %v1563 = vsub.s32 %v1523, %v1562
          %v1564 = vrot.slane %v1487, %v1563
          %v1565 = vsel %vm1528, %v1564, %v1560
          %v1566 = vlaneseq
          %v1567 = vshrl.u32 %v1566, 7
          %v1568 = vsub.s32 %v1501, %v1567
          %v1569 = vrot.slane %v1489, %v1568
          %v1570 = vlaneseq
          %v1571 = vshrl.u32 %v1570, 7
          %v1572 = vsub.s32 %v1523, %v1571
          %v1573 = vrot.slane %v1491, %v1572
          %v1574 = vsel %vm1528, %v1573, %v1569
          %v1575 = vlaneseq
          %v1576 = vshrl.u32 %v1575, 7
          %v1577 = vsub.s32 %v1501, %v1576
          %v1578 = vrot.slane %v1493, %v1577
          %v1579 = vlaneseq
          %v1580 = vshrl.u32 %v1579, 7
          %v1581 = vsub.s32 %v1523, %v1580
          %v1582 = vrot.slane %v1495, %v1581
          %v1583 = vsel %vm1528, %v1582, %v1578
          %v1584 = vlaneseq
          %v1585 = vshrl.u32 %v1584, 7
          %v1586 = vsub.s32 %v1501, %v1585
          %v1587 = vrot.slane %v1497, %v1586
          %v1588 = vlaneseq
          %v1589 = vshrl.u32 %v1588, 7
          %v1590 = vsub.s32 %v1523, %v1589
          %v1591 = vrot.slane %v1499, %v1590
          %v1592 = vsel %vm1528, %v1591, %v1587
          %vm1593 = vcmask 1041409
          %v1594 = vsel %vm1593, %v1538, %v1529
          %vm1595 = vcmask 1042434
          %v1596 = vsel %vm1595, %v1547, %v1594
          %vm1597 = vcmask 1043459
          %v1598 = vsel %vm1597, %v1556, %v1596
          %vm1599 = vcmask 1044484
          %v1600 = vsel %vm1599, %v1565, %v1598
          %vm1601 = vcmask 1045509
          %v1602 = vsel %vm1601, %v1574, %v1600
          %vm1603 = vcmask 1046534
          %v1604 = vsel %vm1603, %v1583, %v1602
          %vm1605 = vcmask 1047559
          %v1606 = vsel %vm1605, %v1592, %v1604
          %v1608 = vsel %vm1502, %v1606, -1e+30
          %vm1609 = vcmask 130048
          %v1610 = vsel %vm1609, %v1608, -inf
          %1611 = vmax.xlane.f32.xlu0 %v1610
          %v1612 = vpop.xlane.xlu0 %1611
          %v1613 = vsub.f32 %v1608, %v1612
          %v1614 = vmul.f32 %v1613, 1.442695
          %v1615 = vpow.pop %v1614
          %v1616 = vsel %vm1609, %v1615, 0.0
          %1617 = vadd.xlane.f32.xlu0 %v1616
          %v1618 = vpop.xlane.xlu0 %1617
          %v1619 = vrcp.pop %v1618
          %v1620 = vmul.f32 %v1615, %v1619
          %v1621 = vlaneseq
          %v1622 = vshrl.u32 %v1621, 7
          %v1623 = vsub.s32 0, %v1622
          %v1624 = vrot.slane %v1620, %v1623
          %1626 = vbcast.lane.b32.xlu0 %v1624, 256
          %v1627 = vpop.permute.xlu0 %1626
          %s1629 = sor.u32 256, 8
          %1630 = vbcast.lane.b32.xlu0 %v1624, %s1629
          %v1631 = vpop.permute.xlu0 %1630
          %v1632 = vlaneseq
          %v1633 = vshrl.u32 %v1632, 7
          %v1634 = vsub.s32 1, %v1633
          %v1635 = vrot.slane %v1620, %v1634
          %1637 = vbcast.lane.b32.xlu0 %v1635, 256
          %v1638 = vpop.permute.xlu0 %1637
          %s1640 = sor.u32 256, 8
          %1641 = vbcast.lane.b32.xlu0 %v1635, %s1640
          %v1642 = vpop.permute.xlu0 %1641
          %v1643 = vlaneseq
          %v1644 = vshrl.u32 %v1643, 7
          %v1645 = vsub.s32 2, %v1644
          %v1646 = vrot.slane %v1620, %v1645
          %1648 = vbcast.lane.b32.xlu0 %v1646, 256
          %v1649 = vpop.permute.xlu0 %1648
          %s1651 = sor.u32 256, 8
          %1652 = vbcast.lane.b32.xlu0 %v1646, %s1651
          %v1653 = vpop.permute.xlu0 %1652
          %v1654 = vlaneseq
          %v1655 = vshrl.u32 %v1654, 7
          %v1656 = vsub.s32 3, %v1655
          %v1657 = vrot.slane %v1620, %v1656
          %1659 = vbcast.lane.b32.xlu0 %v1657, 256
          %v1660 = vpop.permute.xlu0 %1659
          %s1662 = sor.u32 256, 8
          %1663 = vbcast.lane.b32.xlu0 %v1657, %s1662
          %v1664 = vpop.permute.xlu0 %1663
          %v1665 = vlaneseq
          %v1666 = vshrl.u32 %v1665, 7
          %v1667 = vsub.s32 4, %v1666
          %v1668 = vrot.slane %v1620, %v1667
          %1670 = vbcast.lane.b32.xlu0 %v1668, 256
          %v1671 = vpop.permute.xlu0 %1670
          %s1673 = sor.u32 256, 8
          %1674 = vbcast.lane.b32.xlu0 %v1668, %s1673
          %v1675 = vpop.permute.xlu0 %1674
          %v1676 = vlaneseq
          %v1677 = vshrl.u32 %v1676, 7
          %v1678 = vsub.s32 5, %v1677
          %v1679 = vrot.slane %v1620, %v1678
          %1681 = vbcast.lane.b32.xlu0 %v1679, 256
          %v1682 = vpop.permute.xlu0 %1681
          %s1684 = sor.u32 256, 8
          %1685 = vbcast.lane.b32.xlu0 %v1679, %s1684
          %v1686 = vpop.permute.xlu0 %1685
          %v1687 = vlaneseq
          %v1688 = vshrl.u32 %v1687, 7
          %v1689 = vsub.s32 6, %v1688
          %v1690 = vrot.slane %v1620, %v1689
          %1692 = vbcast.lane.b32.xlu0 %v1690, 256
          %v1693 = vpop.permute.xlu0 %1692
          %s1695 = sor.u32 256, 8
          %1696 = vbcast.lane.b32.xlu0 %v1690, %s1695
          %v1697 = vpop.permute.xlu0 %1696
          %v1698 = vlaneseq
          %v1699 = vshrl.u32 %v1698, 7
          %v1700 = vsub.s32 7, %v1699
          %v1701 = vrot.slane %v1620, %v1700
          %1703 = vbcast.lane.b32.xlu0 %v1701, 256
          %v1704 = vpop.permute.xlu0 %1703
          %s1706 = sor.u32 256, 8
          %1707 = vbcast.lane.b32.xlu0 %v1701, %s1706
          %v1708 = vpop.permute.xlu0 %1707
          %v1709 = vld [vmem:[#allocation10] sm:$0xff]
          %v1710 = vld [vmem:[#allocation10 + $0x8] sm:$0xff]
          %v1711 = vld [vmem:[#allocation10 + $0x10] sm:$0xff]
          %v1712 = vld [vmem:[#allocation10 + $0x18] sm:$0xff]
          %v1713 = vld [vmem:[#allocation10 + $0x20] sm:$0xff]
          %v1714 = vld [vmem:[#allocation10 + $0x28] sm:$0xff]
          %v1715 = vld [vmem:[#allocation10 + $0x30] sm:$0xff]
          %v1716 = vld [vmem:[#allocation10 + $0x38] sm:$0xff]
          %v1717 = vld [vmem:[#allocation10 + $0x40] sm:$0xff]
          %v1718 = vld [vmem:[#allocation10 + $0x48] sm:$0xff]
          %v1719 = vld [vmem:[#allocation10 + $0x50] sm:$0xff]
          %v1720 = vld [vmem:[#allocation10 + $0x58] sm:$0xff]
          %v1721 = vld [vmem:[#allocation10 + $0x60] sm:$0xff]
          %v1722 = vld [vmem:[#allocation10 + $0x68] sm:$0xff]
          %v1723 = vld [vmem:[#allocation10 + $0x70] sm:$0xff]
          %v1724 = vld [vmem:[#allocation10 + $0x78] sm:$0xff]
          %v1725 = vmul.f32 %v1627, %v1709
          %v1726 = vmul.f32 %v1631, %v1710
          %v1727 = vmul.f32 %v1638, %v1711
          %v1728 = vmul.f32 %v1642, %v1712
          %v1729 = vmul.f32 %v1649, %v1713
          %v1730 = vmul.f32 %v1653, %v1714
          %v1731 = vmul.f32 %v1660, %v1715
          %v1732 = vmul.f32 %v1664, %v1716
          %v1733 = vmul.f32 %v1671, %v1717
          %v1734 = vmul.f32 %v1675, %v1718
          %v1735 = vmul.f32 %v1682, %v1719
          %v1736 = vmul.f32 %v1686, %v1720
          %v1737 = vmul.f32 %v1693, %v1721
          %v1738 = vmul.f32 %v1697, %v1722
          %v1739 = vmul.f32 %v1704, %v1723
          %v1740 = vmul.f32 %v1708, %v1724
          %v1741 = vadd.f32 %v1725, %v1726
          %v1742 = vrot.slane %v1741, 4
          %v1743 = vadd.f32 %v1741, %v1742
          %v1744 = vrot.slane %v1743, 2
          %v1745 = vadd.f32 %v1743, %v1744
          %v1746 = vrot.slane %v1745, 1
          %v1747 = vadd.f32 %v1745, %v1746
          %v1748 = vadd.f32 %v1727, %v1728
          %v1749 = vrot.slane %v1748, 4
          %v1750 = vadd.f32 %v1748, %v1749
          %v1751 = vrot.slane %v1750, 2
          %v1752 = vadd.f32 %v1750, %v1751
          %v1753 = vrot.slane %v1752, 1
          %v1754 = vadd.f32 %v1752, %v1753
          %v1755 = vadd.f32 %v1729, %v1730
          %v1756 = vrot.slane %v1755, 4
          %v1757 = vadd.f32 %v1755, %v1756
          %v1758 = vrot.slane %v1757, 2
          %v1759 = vadd.f32 %v1757, %v1758
          %v1760 = vrot.slane %v1759, 1
          %v1761 = vadd.f32 %v1759, %v1760
          %v1762 = vadd.f32 %v1731, %v1732
          %v1763 = vrot.slane %v1762, 4
          %v1764 = vadd.f32 %v1762, %v1763
          %v1765 = vrot.slane %v1764, 2
          %v1766 = vadd.f32 %v1764, %v1765
          %v1767 = vrot.slane %v1766, 1
          %v1768 = vadd.f32 %v1766, %v1767
          %v1769 = vadd.f32 %v1733, %v1734
          %v1770 = vrot.slane %v1769, 4
          %v1771 = vadd.f32 %v1769, %v1770
          %v1772 = vrot.slane %v1771, 2
          %v1773 = vadd.f32 %v1771, %v1772
          %v1774 = vrot.slane %v1773, 1
          %v1775 = vadd.f32 %v1773, %v1774
          %v1776 = vadd.f32 %v1735, %v1736
          %v1777 = vrot.slane %v1776, 4
          %v1778 = vadd.f32 %v1776, %v1777
          %v1779 = vrot.slane %v1778, 2
          %v1780 = vadd.f32 %v1778, %v1779
          %v1781 = vrot.slane %v1780, 1
          %v1782 = vadd.f32 %v1780, %v1781
          %v1783 = vadd.f32 %v1737, %v1738
          %v1784 = vrot.slane %v1783, 4
          %v1785 = vadd.f32 %v1783, %v1784
          %v1786 = vrot.slane %v1785, 2
          %v1787 = vadd.f32 %v1785, %v1786
          %v1788 = vrot.slane %v1787, 1
          %v1789 = vadd.f32 %v1787, %v1788
          %v1790 = vadd.f32 %v1739, %v1740
          %v1791 = vrot.slane %v1790, 4
          %v1792 = vadd.f32 %v1790, %v1791
          %v1793 = vrot.slane %v1792, 2
          %v1794 = vadd.f32 %v1792, %v1793
          %v1795 = vrot.slane %v1794, 1
          %v1796 = vadd.f32 %v1794, %v1795
          %1797 = vst [vmem:[#allocation19] sm:$0xff] %v1213
          %1798 = vst.msk [vmem:[#allocation20] sm:$0xff] %vm1609, %v1620
          %1799 = vst [vmem:[#allocation2] sm:$0xff] %v1213
          %v1808 = vsel %vm1593, %v1754, %v1747
          %v1809 = vsel %vm1595, %v1761, %v1808
          %v1810 = vsel %vm1597, %v1768, %v1809
          %v1811 = vsel %vm1599, %v1775, %v1810
          %v1812 = vsel %vm1601, %v1782, %v1811
          %v1813 = vsel %vm1603, %v1789, %v1812
          %v1814 = vsel %vm1605, %v1796, %v1813
          %1816 = vst [vmem:[#allocation2 + $0x8] sm:$0xff] %v1814
        $region108: #{tpu_custom_call.1} parent=71 // pred_fallthru
          _
        %v1817 = vld [vmem:[#allocation2] sm:$0xff]
        %v1818 = vld [vmem:[#allocation2 + $0x8] sm:$0xff]
        %v1819 = vpack.c.bf16 %v1817, %v1817
        %v1820 = vpack.c.bf16 %v1818, %v1818
        %v1821 = vld [vmem:[%s565] sm:$0xff]
        %v1822 = vld [vmem:[%s565 + $0x8] sm:$0xff]
        %v1823 = vld [vmem:[%s565 + $0x10] sm:$0xff]
        %v1824 = vld [vmem:[%s565 + $0x18] sm:$0xff]
        %v1825 = vld [vmem:[%s565 + $0x20] sm:$0xff]
        %v1826 = vld [vmem:[%s565 + $0x28] sm:$0xff]
        %v1827 = vld [vmem:[%s565 + $0x30] sm:$0xff]
        %v1828 = vld [vmem:[%s565 + $0x38] sm:$0xff]
        %v1829 = vld [vmem:[%s565 + $0x40] sm:$0xff]
        %v1830 = vld [vmem:[%s565 + $0x48] sm:$0xff]
        %v1831 = vld [vmem:[%s565 + $0x50] sm:$0xff]
        %v1832 = vld [vmem:[%s565 + $0x58] sm:$0xff]
        %v1833 = vld [vmem:[%s565 + $0x60] sm:$0xff]
        %v1834 = vld [vmem:[%s565 + $0x68] sm:$0xff]
        %v1835 = vld [vmem:[%s565 + $0x70] sm:$0xff]
        %v1836 = vld [vmem:[%s565 + $0x78] sm:$0xff]
        %v1837 = vld [vmem:[%s565 + $0x80] sm:$0xff]
        %v1838 = vld [vmem:[%s565 + $0x88] sm:$0xff]
        %v1839 = vld [vmem:[%s565 + $0x90] sm:$0xff]
        %v1840 = vld [vmem:[%s565 + $0x98] sm:$0xff]
        %v1841 = vld [vmem:[%s565 + $0xa0] sm:$0xff]
        %v1842 = vld [vmem:[%s565 + $0xa8] sm:$0xff]
        %v1843 = vld [vmem:[%s565 + $0xb0] sm:$0xff]
        %v1844 = vld [vmem:[%s565 + $0xb8] sm:$0xff]
        %v1845 = vld [vmem:[%s565 + $0xc0] sm:$0xff]
        %v1846 = vld [vmem:[%s565 + $0xc8] sm:$0xff]
        %v1847 = vld [vmem:[%s565 + $0xd0] sm:$0xff]
        %v1848 = vld [vmem:[%s565 + $0xd8] sm:$0xff]
        %v1849 = vld [vmem:[%s565 + $0xe0] sm:$0xff]
        %v1850 = vld [vmem:[%s565 + $0xe8] sm:$0xff]
        %v1851 = vld [vmem:[%s565 + $0xf0] sm:$0xff]
        %v1852 = vld [vmem:[%s565 + $0xf8] sm:$0xff]
        %v1853 = vld [vmem:[%s621] sm:$0x3]
        %v1855 = vlaneseq
        %v1856 = vshrl.u32 %v1855, 7
        %v1857 = vsub.s32 0, %v1856
        %v1858 = vrot.slane %v1853, %v1857
        %v1859 = vlaneseq
        %v1860 = vshrl.u32 %v1859, 7
        %v1861 = vsub.s32 1, %v1860
        %v1862 = vrot.slane %v1853, %v1861
        %v1897 = vunpack.c.l.b16 %v1821
        %v1898 = vunpack.c.h.b16 %v1821
        %v1899 = vunpack.c.l.b16 %v1822
        %v1900 = vunpack.c.h.b16 %v1822
        %v1901 = vunpack.c.l.b16 %v1823
        %v1902 = vunpack.c.h.b16 %v1823
        %v1903 = vunpack.c.l.b16 %v1824
        %v1904 = vunpack.c.h.b16 %v1824
        %v1905 = vunpack.c.l.b16 %v1825
        %v1906 = vunpack.c.h.b16 %v1825
        %v1907 = vunpack.c.l.b16 %v1826
        %v1908 = vunpack.c.h.b16 %v1826
        %v1909 = vunpack.c.l.b16 %v1827
        %v1910 = vunpack.c.h.b16 %v1827
        %v1911 = vunpack.c.l.b16 %v1828
        %v1912 = vunpack.c.h.b16 %v1828
        %v1913 = vunpack.c.l.b16 %v1829
        %v1914 = vunpack.c.h.b16 %v1829
        %v1915 = vunpack.c.l.b16 %v1830
        %v1916 = vunpack.c.h.b16 %v1830
        %v1917 = vunpack.c.l.b16 %v1831
        %v1918 = vunpack.c.h.b16 %v1831
        %v1919 = vunpack.c.l.b16 %v1832
        %v1920 = vunpack.c.h.b16 %v1832
        %v1921 = vunpack.c.l.b16 %v1833
        %v1922 = vunpack.c.h.b16 %v1833
        %v1923 = vunpack.c.l.b16 %v1834
        %v1924 = vunpack.c.h.b16 %v1834
        %v1925 = vunpack.c.l.b16 %v1835
        %v1926 = vunpack.c.h.b16 %v1835
        %v1927 = vunpack.c.l.b16 %v1836
        %v1928 = vunpack.c.h.b16 %v1836
        %v1929 = vunpack.c.l.b16 %v1837
        %v1930 = vunpack.c.h.b16 %v1837
        %v1931 = vunpack.c.l.b16 %v1838
        %v1932 = vunpack.c.h.b16 %v1838
        %v1933 = vunpack.c.l.b16 %v1839
        %v1934 = vunpack.c.h.b16 %v1839
        %v1935 = vunpack.c.l.b16 %v1840
        %v1936 = vunpack.c.h.b16 %v1840
        %v1937 = vunpack.c.l.b16 %v1841
        %v1938 = vunpack.c.h.b16 %v1841
        %v1939 = vunpack.c.l.b16 %v1842
        %v1940 = vunpack.c.h.b16 %v1842
        %v1941 = vunpack.c.l.b16 %v1843
        %v1942 = vunpack.c.h.b16 %v1843
        %v1943 = vunpack.c.l.b16 %v1844
        %v1944 = vunpack.c.h.b16 %v1844
        %v1945 = vunpack.c.l.b16 %v1845
        %v1946 = vunpack.c.h.b16 %v1845
        %v1947 = vunpack.c.l.b16 %v1846
        %v1948 = vunpack.c.h.b16 %v1846
        %v1949 = vunpack.c.l.b16 %v1847
        %v1950 = vunpack.c.h.b16 %v1847
        %v1951 = vunpack.c.l.b16 %v1848
        %v1952 = vunpack.c.h.b16 %v1848
        %v1953 = vunpack.c.l.b16 %v1849
        %v1954 = vunpack.c.h.b16 %v1849
        %v1955 = vunpack.c.l.b16 %v1850
        %v1956 = vunpack.c.h.b16 %v1850
        %v1957 = vunpack.c.l.b16 %v1851
        %v1958 = vunpack.c.h.b16 %v1851
        %v1959 = vunpack.c.l.b16 %v1852
        %v1960 = vunpack.c.h.b16 %v1852
        %v1961 = vpack.c.b16 %v1899, %v1897
        %v1962 = vpack.c.b16 %v1900, %v1898
        %v1963 = vpack.c.b16 %v1903, %v1901
        %v1964 = vpack.c.b16 %v1904, %v1902
        %v1965 = vpack.c.b16 %v1907, %v1905
        %v1966 = vpack.c.b16 %v1908, %v1906
        %v1967 = vpack.c.b16 %v1911, %v1909
        %v1968 = vpack.c.b16 %v1912, %v1910
        %v1969 = vpack.c.b16 %v1915, %v1913
        %v1970 = vpack.c.b16 %v1916, %v1914
        %v1971 = vpack.c.b16 %v1919, %v1917
        %v1972 = vpack.c.b16 %v1920, %v1918
        %v1973 = vpack.c.b16 %v1923, %v1921
        %v1974 = vpack.c.b16 %v1924, %v1922
        %v1975 = vpack.c.b16 %v1927, %v1925
        %v1976 = vpack.c.b16 %v1928, %v1926
        %v1977 = vpack.c.b16 %v1931, %v1929
        %v1978 = vpack.c.b16 %v1932, %v1930
        %v1979 = vpack.c.b16 %v1935, %v1933
        %v1980 = vpack.c.b16 %v1936, %v1934
        %v1981 = vpack.c.b16 %v1939, %v1937
        %v1982 = vpack.c.b16 %v1940, %v1938
        %v1983 = vpack.c.b16 %v1943, %v1941
        %v1984 = vpack.c.b16 %v1944, %v1942
        %v1985 = vpack.c.b16 %v1947, %v1945
        %v1986 = vpack.c.b16 %v1948, %v1946
        %v1987 = vpack.c.b16 %v1951, %v1949
        %v1988 = vpack.c.b16 %v1952, %v1950
        %v1989 = vpack.c.b16 %v1955, %v1953
        %v1990 = vpack.c.b16 %v1956, %v1954
        %v1991 = vpack.c.b16 %v1959, %v1957
        %v1992 = vpack.c.b16 %v1960, %v1958
        %2025 = vmatprep.subr.bf16.mxu0 %v1976
        %2026 = vmatpush1.bf16.msra.mxu0 %v1975
        %2027 = vmatprep.subr.bf16.mxu0 %v1974
        %2028 = vmatpush1.bf16.msra.mxu0 %v1973
        %2029 = vmatprep.subr.bf16.mxu0 %v1972
        %2030 = vmatpush1.bf16.msra.mxu0 %v1971
        %2031 = vmatprep.subr.bf16.mxu0 %v1970
        %2032 = vmatpush1.bf16.msra.mxu0 %v1969
        %2033 = vmatprep.subr.bf16.mxu0 %v1968
        %2034 = vmatpush1.bf16.msra.mxu0 %v1967
        %2035 = vmatprep.subr.bf16.mxu0 %v1966
        %2036 = vmatpush1.bf16.msra.mxu0 %v1965
        %2037 = vmatprep.subr.bf16.mxu0 %v1964
        %2038 = vmatpush1.bf16.msra.mxu0 %v1963
        %2039 = vmatprep.subr.bf16.mxu0 %v1962
        %2040 = vmatpush1.bf16.msra.mxu0 %v1961
        %2041 = vmatprep.subr.bf16.mxu0 %v1992
        %2042 = vmatpush2.bf16.msra.mxu0 %v1991
        %2043 = vmatprep.subr.bf16.mxu0 %v1990
        %2044 = vmatpush2.bf16.msra.mxu0 %v1989
        %2045 = vmatprep.subr.bf16.mxu0 %v1988
        %2046 = vmatpush2.bf16.msra.mxu0 %v1987
        %2047 = vmatprep.subr.bf16.mxu0 %v1986
        %2048 = vmatpush2.bf16.msra.mxu0 %v1985
        %2049 = vmatprep.subr.bf16.mxu0 %v1984
        %2050 = vmatpush2.bf16.msra.mxu0 %v1983
        %2051 = vmatprep.subr.bf16.mxu0 %v1982
        %2052 = vmatpush2.bf16.msra.mxu0 %v1981
        %2053 = vmatprep.subr.bf16.mxu0 %v1980
        %2054 = vmatpush2.bf16.msra.mxu0 %v1979
        %2055 = vmatprep.subr.bf16.mxu0 %v1978
        %2056 = vmatpush2.bf16.msra.mxu0 %v1977
        %2057 = vmatprep.mubr.bf16.mxu0 %v1820
        %2058 = vmatmul.mubr.bf16.gmra.mxu0 %v1819
        %v2059 = vpop.f32.mrf.mxu0
        %v2060 = vadd.f32 %v1858, %v2059
        %v2061 = vpop.f32.mrf.mxu0
        %v2062 = vadd.f32 %v1862, %v2061
        %v2063 = vpop.f32.mrf.mxu0
        %v2064 = vpop.f32.mrf.mxu0
        %2065 = vdwg.mxu0
        %2066 = vst [vmem:[%s616] sm:$0xff] %v2060
        %2067 = vst [vmem:[%s616 + $0x8] sm:$0xff] %v2062
        %s2068 = sand.u32 %s35, 1
        %s2069 = scalar_lea.sflag [#allocation7], %s2068
        %s2070 = sand.u32 %s368, 1
        %s2071 = smul.addr %s2070, 16
        %s2072 = scalar_lea.vmem [#allocation22], %s2071
        // Predicated region
        $region141: #{tpu_custom_call.1} parent=71 // pred_check
          %p2073 = pneg %p331
        $region142: #{tpu_custom_call.1} parent=71 // pred_check_branch
          %2075 = sbr.rel (%p2073) target = $region144
        $region143: #{tpu_custom_call.1} parent=71 // pred_region
          %s2077 = ssub.s32 128, 128
          %2078 = vsyncadd [#allocation7], %s2077
          %s2080 = sshll.u32 [#allocation19], 4
          %s2081 = int_to_ptr.vmem [resolvable:$true] %s2080
          %2083 = dma.vmem_to_hbm [thread:$0]  %s2081, 128, %s14, [#allocation7]
        $region144: #{tpu_custom_call.1} parent=71 // pred_fallthru
          _
        // Predicated region
        $region145: #{tpu_custom_call.1} parent=71 // pred_check
          %p2084 = pneg %p352
        $region146: #{tpu_custom_call.1} parent=71 // pred_check_branch
          %2086 = sbr.rel (%p2084) target = $region148
        $region147: #{tpu_custom_call.1} parent=71 // pred_region
          %s2088 = ssub.s32 128, 128
          %2089 = vsyncadd [#allocation21], %s2088
          %s2091 = sshll.u32 [#allocation20], 4
          %s2092 = int_to_ptr.vmem [resolvable:$true] %s2091
          %2094 = dma.vmem_to_hbm [thread:$0]  %s2092, 128, %s15, [#allocation21]
        $region148: #{tpu_custom_call.1} parent=71 // pred_fallthru
          _
        // Predicated region
        $region149: #{tpu_custom_call.1} parent=71 // pred_check
          %p2095 = pneg %p378
        $region150: #{tpu_custom_call.1} parent=71 // pred_check_branch
          %2097 = sbr.rel (%p2095) target = $region152
        $region151: #{tpu_custom_call.1} parent=71 // pred_region
          %s2098 = smul.u32 2, %s35
          %s2100 = ssub.s32 256, 256
          %2101 = vsyncadd %s2069, %s2100
          %s2102 = smul.addr %s2098, 128
          %s2103 = scalar_lea.hbm %s16, %s2102
          %s2105 = sshll.u32 %s2072, 4
          %s2106 = int_to_ptr.vmem [resolvable:$true] %s2105
          %2108 = dma.vmem_to_hbm [thread:$0]  %s2106, 256, %s2103, %s2069
        $region152: #{tpu_custom_call.1} parent=71 // pred_fallthru
          _
        // Predicated region
        $region153: #{tpu_custom_call.1} parent=71 // pred_check
          %p2109 = pneg %p331
        $region154: #{tpu_custom_call.1} parent=71 // pred_check_branch
          %2111 = sbr.rel (%p2109) target = $region156
        $region155: #{tpu_custom_call.1} parent=71 // pred_region
          %2112 = dma.done [#allocation7], 128
        $region156: #{tpu_custom_call.1} parent=71 // pred_fallthru
          _
        // Predicated region
        $region157: #{tpu_custom_call.1} parent=71 // pred_check
          %p2113 = pneg %p352
        $region158: #{tpu_custom_call.1} parent=71 // pred_check_branch
          %2115 = sbr.rel (%p2113) target = $region160
        $region159: #{tpu_custom_call.1} parent=71 // pred_region
          %2116 = dma.done [#allocation21], 128
        $region160: #{tpu_custom_call.1} parent=71 // pred_fallthru
          _
      $region72: #{tpu_custom_call.1} parent=5 // pred_fallthru
        _
      %p2117 = scmp.le.s32.totalorder 2, %s30
      // Predicated region
      $region161: #{tpu_custom_call.1} parent=5 // pred_check
        %p2118 = pneg %p2117
      $region162: #{tpu_custom_call.1} parent=5 // pred_check_branch
        %2120 = sbr.rel (%p2118) target = $region164
      $region163: #{tpu_custom_call.1} parent=5 // pred_region
        %s2121 = ssub.s32 %s30, 2
        // Predicated region
        $region165: #{tpu_custom_call.1} parent=163 // pred_check
          %p2122 = pneg %p384
        $region166: #{tpu_custom_call.1} parent=163 // pred_check_branch
          %2124 = sbr.rel (%p2122) target = $region168
        $region167: #{tpu_custom_call.1} parent=163 // pred_region
          %s2125 = sand.u32 %s36, 1
          %s2126 = scalar_lea.sflag [#allocation7], %s2125
          %s2127 = sand.u32 %s369, 1
          %s2128 = smul.addr %s2127, 16
          %s2129 = scalar_lea.vmem [#allocation22], %s2128
          %2130 = dma.done %s2126, 256
        $region168: #{tpu_custom_call.1} parent=163 // pred_fallthru
          _
      $region164: #{tpu_custom_call.1} parent=5 // pred_fallthru
        _
    $region6: #{tpu_custom_call.1} parent=1 // loop_footer
      %s34 = sadd.s32 1, %s30
    $region7: #{tpu_custom_call.1} parent=1 // loop_footer_branch
      %29 = sbr.rel target = $region3
    $region8: #{tpu_custom_call.1} parent=1 // loop_exit
      _
    %2131 = vsyncpa [#allocation6], 1
    %s2132 = scalar_lea.sflag [#allocation6], 1
    %2133 = vsyncpa %s2132, 1
    %2134 = vsyncpa [#allocation11], 1
    %2135 = vsyncpa [#allocation14], 1
    %2136 = vsyncpa [#allocation17], 1
    %2137 = vsyncpa [#allocation7], 1
    %s2138 = scalar_lea.sflag [#allocation7], 1
    %2139 = vsyncpa %s2138, 1
    %2140 = vsyncpa [#allocation21], 1
    %2141 = vsyncpa [#allocation8], 1
    %s2142 = scalar_lea.sflag [#allocation8], 1
    %2143 = vsyncpa %s2142, 1
  %2144 = vsyncmov [#allocation4]
  %s2145 = vpop.sfrf %2144
  %p2146 = scmp.eq.s32.totalorder %s2145, 0
  %p2147 = pneg %p2146
  %2149 = shalt.err (%p2147)
  %s2150 = scalar_lea.sflag [#allocation4], 1
  %2151 = vsyncmov %s2150
  %s2152 = vpop.sfrf %2151
  %p2153 = scmp.eq.s32.totalorder %s2152, 0
  %p2154 = pneg %p2153
  %2156 = shalt.err (%p2154)
  %s2157 = scalar_lea.sflag [#allocation4], 2
  %2158 = vsyncmov %s2157
  %s2159 = vpop.sfrf %2158
  %p2160 = scmp.eq.s32.totalorder %s2159, 0
  %p2161 = pneg %p2160
  %2163 = shalt.err (%p2161)
  %s2164 = scalar_lea.sflag [#allocation4], 3
  %2165 = vsyncmov %s2164
  %s2166 = vpop.sfrf %2165
  %p2167 = scmp.eq.s32.totalorder %s2166, 0
  %p2168 = pneg %p2167
  %2170 = shalt.err (%p2168)
  %s2171 = scalar_lea.sflag [#allocation4], 4
  %2172 = vsyncmov %s2171
  %s2173 = vpop.sfrf %2172
  %p2174 = scmp.eq.s32.totalorder %s2173, 0
  %p2175 = pneg %p2174
  %2177 = shalt.err (%p2175)
  %s2178 = scalar_lea.sflag [#allocation4], 5
  %2179 = vsyncmov %s2178
  %s2180 = vpop.sfrf %2179
  %p2181 = scmp.eq.s32.totalorder %s2180, 0
  %p2182 = pneg %p2181
  %2184 = shalt.err (%p2182)
  %s2185 = scalar_lea.sflag [#allocation4], 6
  %2186 = vsyncmov %s2185
  %s2187 = vpop.sfrf %2186
  %p2188 = scmp.eq.s32.totalorder %s2187, 0
  %p2189 = pneg %p2188
  %2191 = shalt.err (%p2189)
  %s2192 = scalar_lea.sflag [#allocation4], 7
  %2193 = vsyncmov %s2192
  %s2194 = vpop.sfrf %2193
  %p2195 = scmp.eq.s32.totalorder %s2194, 0
  %p2196 = pneg %p2195
  %2198 = shalt.err (%p2196)

</llo_original>
